<compile_context>
chip_gen: v6e
topology: v6e:2x2x1
jax: 0.10.0
libtpu: 0.0.40
codegen_flags: <defaults>
</compile_context>

<pallas_src>
import jax
import jax.numpy as jnp
from jax import lax
from jax.experimental import pallas as pl
from jax.experimental.pallas import tpu as pltpu


def _attn_dropout_kernel(scale_ref, p_ref, q_ref, k_ref, v_ref, r_ref, o_ref):
    # q_ref/k_ref/v_ref: (1, H, S, D); r_ref: (1, H, S, S); o_ref: (1, S, H*D)
    inv_scale = scale_ref[0]
    drop_p = p_ref[0]
    keep_scale = jnp.where(drop_p < 1.0, 1.0 / (1.0 - drop_p), 0.0)

    H = q_ref.shape[1]

    outs = []
    for h in range(H):  # static, fully unrolled head loop (H is small)
        qh = q_ref[0, h].astype(jnp.bfloat16)          # (S, D)
        kh = k_ref[0, h].astype(jnp.bfloat16)          # (S, D)
        vh = v_ref[0, h].astype(jnp.bfloat16)          # (S, D)

        # scores: q @ k^T without an explicit transpose (contract last dims),
        # bf16 operands, f32 accumulation on the MXU.
        s = lax.dot_general(qh, kh, (((1,), (1,)), ((), ())),
                            preferred_element_type=jnp.float32)
        s = s * inv_scale                               # (S, S) f32

        # numerically-stable softmax (f32)
        m = jnp.max(s, axis=-1, keepdims=True)
        e = jnp.exp(s - m)
        denom = jnp.sum(e, axis=-1, keepdims=True)
        attn = e * pl.reciprocal(denom, approx=True)

        # inverted dropout (training-mode F.dropout): keep w.p. (1-p), scale 1/(1-p)
        keep = r_ref[0, h] >= drop_p
        attn = jnp.where(keep, attn * keep_scale, 0.0)

        # attn @ v, bf16 operands, f32 accumulation
        outs.append(jnp.dot(attn.astype(jnp.bfloat16), vh,
                            preferred_element_type=jnp.float32))

    # single lane-dense (S, H*D) store for all heads
    o_ref[0] = jnp.concatenate(outs, axis=-1).astype(o_ref.dtype)


@jax.jit
def sdpa_dropout(q, k, v, inv_scale_factor, dropout_p, rng_key):
    B, H, S, D = q.shape
    scale_arr = jnp.reshape(jnp.asarray(inv_scale_factor, jnp.float32), (1,))
    p_arr = jnp.reshape(jnp.asarray(dropout_p, jnp.float32), (1,))
    # TODO(synk): dropout bits could be drawn in-kernel with pltpu.prng_*, but that
    # primitive has no CPU/interpret lowering, so the uniforms are drawn here.
    rand = jax.random.uniform(rng_key, (B, H, S, S), dtype=jnp.float32)

    qkv_spec = pl.BlockSpec((1, H, S, D), lambda b: (b, 0, 0, 0))
    rand_spec = pl.BlockSpec((1, H, S, S), lambda b: (b, 0, 0, 0))
    out_spec = pl.BlockSpec((1, S, H * D), lambda b: (b, 0, 0))
    smem_spec = pl.BlockSpec(memory_space=pltpu.MemorySpace.SMEM)

    out_fused = pl.pallas_call(
        _attn_dropout_kernel,
        out_shape=jax.ShapeDtypeStruct((B, S, H * D), q.dtype),
        grid_spec=pltpu.PrefetchScalarGridSpec(
            num_scalar_prefetch=0,
            grid=(B,),
            in_specs=[smem_spec, smem_spec,
                      qkv_spec, qkv_spec, qkv_spec, rand_spec],
            out_specs=out_spec,
        ),
        compiler_params=pltpu.CompilerParams(
            dimension_semantics=("parallel",)),
    )(scale_arr, p_arr, q, k, v, rand)

    # (B, S, H*D) -> (B, H, S, D); layout plumbing handled by XLA in the wrapper.
    return out_fused.reshape(B, S, H, D).transpose(0, 2, 1, 3)


if __name__ == "__main__":
    B, H, S, D = 2, 4, 64, 32
    key = jax.random.PRNGKey(0)
    kq, kk, kv, kdrop = jax.random.split(key, 4)
    q = jax.random.normal(kq, (B, H, S, D), dtype=jnp.float32)
    k = jax.random.normal(kk, (B, H, S, D), dtype=jnp.float32)
    v = jax.random.normal(kv, (B, H, S, D), dtype=jnp.float32)
    inv_scale_factor = 0.001

    # Correctness check with dropout disabled (p=0 => dropout is identity).
    out_p0 = sdpa_dropout(q, k, v, inv_scale_factor, 0.0, kdrop)
    jax.block_until_ready(out_p0)

    # Reference mirrors the kernel's bf16 operand / f32-accumulate matmuls.
    qb = q.astype(jnp.bfloat16).astype(jnp.float32)
    kb = k.astype(jnp.bfloat16).astype(jnp.float32)
    vb = v.astype(jnp.bfloat16).astype(jnp.float32)
    s_ref = jnp.einsum("bhsd,bhtd->bhst", qb, kb) * inv_scale_factor
    m_ref = jnp.max(s_ref, axis=-1, keepdims=True)
    e_ref = jnp.exp(s_ref - m_ref)
    p_ref = e_ref / jnp.sum(e_ref, axis=-1, keepdims=True)
    ref = jnp.einsum("bhst,bhtd->bhsd",
                     p_ref.astype(jnp.bfloat16).astype(jnp.float32), vb)
    assert out_p0.shape == (B, H, S, D)
    assert jnp.allclose(out_p0, ref, atol=2e-2, rtol=2e-2), "mismatch vs reference (p=0)"

    # Dropout enabled (training-mode inverted dropout; RNG differs from torch).
    out = sdpa_dropout(q, k, v, inv_scale_factor, 0.1, kdrop)
    jax.block_until_ready(out)
    assert out.shape == (B, H, S, D)
    assert bool(jnp.all(jnp.isfinite(out)))

    print("KERNEL_OK")
</pallas_src>

<mosaic_0001>
module attributes {stable_mosaic.version = 11 : i64} {
  func.func @_attn_dropout_kernel(%arg0: i32, %arg1: memref<1xf32, #tpu.memory_space<smem>>, %arg2: memref<1xf32, #tpu.memory_space<smem>>, %arg3: memref<1x4x64x32xf32, #tpu.memory_space<vmem>>, %arg4: memref<1x4x64x32xf32, #tpu.memory_space<vmem>>, %arg5: memref<1x4x64x32xf32, #tpu.memory_space<vmem>>, %arg6: memref<1x4x64x64xf32, #tpu.memory_space<vmem>>, %arg7: memref<1x64x128xf32, #tpu.memory_space<vmem>>) attributes {dimension_semantics = [#tpu.dimension_semantics<parallel>], iteration_bounds = array<i64: 2>, scalar_prefetch = 0 : i64, scratch_operands = 0 : i64, tpu.core_type = #tpu.core_type<tc>, window_params = [{transform_indices = @transform_0, window_bounds = array<i64: 1>}, {transform_indices = @transform_1, window_bounds = array<i64: 1>}, {transform_indices = @transform_2, window_bounds = array<i64: 1, 4, 64, 32>}, {transform_indices = @transform_3, window_bounds = array<i64: 1, 4, 64, 32>}, {transform_indices = @transform_4, window_bounds = array<i64: 1, 4, 64, 32>}, {transform_indices = @transform_5, window_bounds = array<i64: 1, 4, 64, 64>}, {transform_indices = @transform_6, window_bounds = array<i64: 1, 64, 128>}]} {
    %c0 = arith.constant 0 : index
    %0 = memref.load %arg1[%c0] : memref<1xf32, #tpu.memory_space<smem>>
    %c0_0 = arith.constant 0 : index
    %1 = memref.load %arg2[%c0_0] : memref<1xf32, #tpu.memory_space<smem>>
    %cst = arith.constant 1.000000e+00 : f32
    %2 = arith.cmpf olt, %1, %cst : f32
    %cst_1 = arith.constant 1.000000e+00 : f32
    %3 = arith.subf %cst_1, %1 : f32
    %cst_2 = arith.constant 1.000000e+00 : f32
    %4 = arith.divf %cst_2, %3 : f32
    %cst_3 = arith.constant 0.000000e+00 : f32
    %5 = arith.select %2, %4, %cst_3 : f32
    %c0_4 = arith.constant 0 : index
    %c0_5 = arith.constant 0 : index
    %c0_6 = arith.constant 0 : index
    %c0_7 = arith.constant 0 : index
    %6 = vector.load %arg3[%c0_4, %c0_5, %c0_6, %c0_7] : memref<1x4x64x32xf32, #tpu.memory_space<vmem>>, vector<1x1x64x32xf32>
    %7 = vector.shape_cast %6 : vector<1x1x64x32xf32> to vector<64x32xf32>
    %8 = arith.truncf %7 : vector<64x32xf32> to vector<64x32xbf16>
    %c0_8 = arith.constant 0 : index
    %c0_9 = arith.constant 0 : index
    %c0_10 = arith.constant 0 : index
    %c0_11 = arith.constant 0 : index
    %9 = vector.load %arg4[%c0_8, %c0_9, %c0_10, %c0_11] : memref<1x4x64x32xf32, #tpu.memory_space<vmem>>, vector<1x1x64x32xf32>
    %10 = vector.shape_cast %9 : vector<1x1x64x32xf32> to vector<64x32xf32>
    %11 = arith.truncf %10 : vector<64x32xf32> to vector<64x32xbf16>
    %c0_12 = arith.constant 0 : index
    %c0_13 = arith.constant 0 : index
    %c0_14 = arith.constant 0 : index
    %c0_15 = arith.constant 0 : index
    %12 = vector.load %arg5[%c0_12, %c0_13, %c0_14, %c0_15] : memref<1x4x64x32xf32, #tpu.memory_space<vmem>>, vector<1x1x64x32xf32>
    %13 = vector.shape_cast %12 : vector<1x1x64x32xf32> to vector<64x32xf32>
    %14 = arith.truncf %13 : vector<64x32xf32> to vector<64x32xbf16>
    %cst_16 = arith.constant dense<0.000000e+00> : vector<64x64xf32>
    %15 = tpu.matmul %8, %11, %cst_16 {dimension_numbers = #tpu.dot_dimension_numbers<[1], [1], [0], [0], [0, 0, 1, 0], [], []>} : vector<64x32xbf16>, vector<64x32xbf16>, vector<64x64xf32> -> vector<64x64xf32>
    %16 = vector.broadcast %0 : f32 to vector<64x64xf32>
    %17 = arith.mulf %15, %16 : vector<64x64xf32>
    %cst_17 = arith.constant dense<0xFF800000> : vector<64xf32>
    %18 = vector.multi_reduction <maximumf>, %17, %cst_17 [1] : vector<64x64xf32> to vector<64xf32>
    %19 = vector.shape_cast %18 : vector<64xf32> to vector<64x1xf32>
    %20 = vector.broadcast %19 : vector<64x1xf32> to vector<64x64xf32>
    %21 = arith.subf %17, %20 : vector<64x64xf32>
    %22 = math.exp %21 : vector<64x64xf32>
    %cst_18 = arith.constant dense<0.000000e+00> : vector<64xf32>
    %23 = vector.multi_reduction <add>, %22, %cst_18 [1] : vector<64x64xf32> to vector<64xf32>
    %24 = vector.shape_cast %23 : vector<64xf32> to vector<64x1xf32>
    %25 = tpu.reciprocal %24 {approx = true} : vector<64x1xf32> -> vector<64x1xf32>
    %26 = vector.broadcast %25 : vector<64x1xf32> to vector<64x64xf32>
    %27 = arith.mulf %22, %26 : vector<64x64xf32>
    %c0_19 = arith.constant 0 : index
    %c0_20 = arith.constant 0 : index
    %c0_21 = arith.constant 0 : index
    %c0_22 = arith.constant 0 : index
    %28 = vector.load %arg6[%c0_19, %c0_20, %c0_21, %c0_22] : memref<1x4x64x64xf32, #tpu.memory_space<vmem>>, vector<1x1x64x64xf32>
    %29 = vector.shape_cast %28 : vector<1x1x64x64xf32> to vector<64x64xf32>
    %30 = vector.broadcast %1 : f32 to vector<64x64xf32>
    %31 = arith.cmpf oge, %29, %30 : vector<64x64xf32>
    %32 = vector.broadcast %5 : f32 to vector<64x64xf32>
    %33 = arith.mulf %27, %32 : vector<64x64xf32>
    %cst_23 = arith.constant 0.000000e+00 : f32
    %34 = vector.broadcast %cst_23 : f32 to vector<64x64xf32>
    %35 = arith.select %31, %33, %34 : vector<64x64xi1>, vector<64x64xf32>
    %36 = arith.truncf %35 : vector<64x64xf32> to vector<64x64xbf16>
    %cst_24 = arith.constant dense<0.000000e+00> : vector<64x32xf32>
    %37 = tpu.matmul %36, %14, %cst_24 {dimension_numbers = #tpu.dot_dimension_numbers<[1], [0], [0], [1], [0, 0, 1, 1], [], []>} : vector<64x64xbf16>, vector<64x32xbf16>, vector<64x32xf32> -> vector<64x32xf32>
    %c0_25 = arith.constant 0 : index
    %c1 = arith.constant 1 : index
    %c0_26 = arith.constant 0 : index
    %c0_27 = arith.constant 0 : index
    %38 = vector.load %arg3[%c0_25, %c1, %c0_26, %c0_27] : memref<1x4x64x32xf32, #tpu.memory_space<vmem>>, vector<1x1x64x32xf32>
    %39 = vector.shape_cast %38 : vector<1x1x64x32xf32> to vector<64x32xf32>
    %40 = arith.truncf %39 : vector<64x32xf32> to vector<64x32xbf16>
    %c0_28 = arith.constant 0 : index
    %c1_29 = arith.constant 1 : index
    %c0_30 = arith.constant 0 : index
    %c0_31 = arith.constant 0 : index
    %41 = vector.load %arg4[%c0_28, %c1_29, %c0_30, %c0_31] : memref<1x4x64x32xf32, #tpu.memory_space<vmem>>, vector<1x1x64x32xf32>
    %42 = vector.shape_cast %41 : vector<1x1x64x32xf32> to vector<64x32xf32>
    %43 = arith.truncf %42 : vector<64x32xf32> to vector<64x32xbf16>
    %c0_32 = arith.constant 0 : index
    %c1_33 = arith.constant 1 : index
    %c0_34 = arith.constant 0 : index
    %c0_35 = arith.constant 0 : index
    %44 = vector.load %arg5[%c0_32, %c1_33, %c0_34, %c0_35] : memref<1x4x64x32xf32, #tpu.memory_space<vmem>>, vector<1x1x64x32xf32>
    %45 = vector.shape_cast %44 : vector<1x1x64x32xf32> to vector<64x32xf32>
    %46 = arith.truncf %45 : vector<64x32xf32> to vector<64x32xbf16>
    %cst_36 = arith.constant dense<0.000000e+00> : vector<64x64xf32>
    %47 = tpu.matmul %40, %43, %cst_36 {dimension_numbers = #tpu.dot_dimension_numbers<[1], [1], [0], [0], [0, 0, 1, 0], [], []>} : vector<64x32xbf16>, vector<64x32xbf16>, vector<64x64xf32> -> vector<64x64xf32>
    %48 = vector.broadcast %0 : f32 to vector<64x64xf32>
    %49 = arith.mulf %47, %48 : vector<64x64xf32>
    %cst_37 = arith.constant dense<0xFF800000> : vector<64xf32>
    %50 = vector.multi_reduction <maximumf>, %49, %cst_37 [1] : vector<64x64xf32> to vector<64xf32>
    %51 = vector.shape_cast %50 : vector<64xf32> to vector<64x1xf32>
    %52 = vector.broadcast %51 : vector<64x1xf32> to vector<64x64xf32>
    %53 = arith.subf %49, %52 : vector<64x64xf32>
    %54 = math.exp %53 : vector<64x64xf32>
    %cst_38 = arith.constant dense<0.000000e+00> : vector<64xf32>
    %55 = vector.multi_reduction <add>, %54, %cst_38 [1] : vector<64x64xf32> to vector<64xf32>
    %56 = vector.shape_cast %55 : vector<64xf32> to vector<64x1xf32>
    %57 = tpu.reciprocal %56 {approx = true} : vector<64x1xf32> -> vector<64x1xf32>
    %58 = vector.broadcast %57 : vector<64x1xf32> to vector<64x64xf32>
    %59 = arith.mulf %54, %58 : vector<64x64xf32>
    %c0_39 = arith.constant 0 : index
    %c1_40 = arith.constant 1 : index
    %c0_41 = arith.constant 0 : index
    %c0_42 = arith.constant 0 : index
    %60 = vector.load %arg6[%c0_39, %c1_40, %c0_41, %c0_42] : memref<1x4x64x64xf32, #tpu.memory_space<vmem>>, vector<1x1x64x64xf32>
    %61 = vector.shape_cast %60 : vector<1x1x64x64xf32> to vector<64x64xf32>
    %62 = vector.broadcast %1 : f32 to vector<64x64xf32>
    %63 = arith.cmpf oge, %61, %62 : vector<64x64xf32>
    %64 = vector.broadcast %5 : f32 to vector<64x64xf32>
    %65 = arith.mulf %59, %64 : vector<64x64xf32>
    %cst_43 = arith.constant 0.000000e+00 : f32
    %66 = vector.broadcast %cst_43 : f32 to vector<64x64xf32>
    %67 = arith.select %63, %65, %66 : vector<64x64xi1>, vector<64x64xf32>
    %68 = arith.truncf %67 : vector<64x64xf32> to vector<64x64xbf16>
    %cst_44 = arith.constant dense<0.000000e+00> : vector<64x32xf32>
    %69 = tpu.matmul %68, %46, %cst_44 {dimension_numbers = #tpu.dot_dimension_numbers<[1], [0], [0], [1], [0, 0, 1, 1], [], []>} : vector<64x64xbf16>, vector<64x32xbf16>, vector<64x32xf32> -> vector<64x32xf32>
    %c0_45 = arith.constant 0 : index
    %c2 = arith.constant 2 : index
    %c0_46 = arith.constant 0 : index
    %c0_47 = arith.constant 0 : index
    %70 = vector.load %arg3[%c0_45, %c2, %c0_46, %c0_47] : memref<1x4x64x32xf32, #tpu.memory_space<vmem>>, vector<1x1x64x32xf32>
    %71 = vector.shape_cast %70 : vector<1x1x64x32xf32> to vector<64x32xf32>
    %72 = arith.truncf %71 : vector<64x32xf32> to vector<64x32xbf16>
    %c0_48 = arith.constant 0 : index
    %c2_49 = arith.constant 2 : index
    %c0_50 = arith.constant 0 : index
    %c0_51 = arith.constant 0 : index
    %73 = vector.load %arg4[%c0_48, %c2_49, %c0_50, %c0_51] : memref<1x4x64x32xf32, #tpu.memory_space<vmem>>, vector<1x1x64x32xf32>
    %74 = vector.shape_cast %73 : vector<1x1x64x32xf32> to vector<64x32xf32>
    %75 = arith.truncf %74 : vector<64x32xf32> to vector<64x32xbf16>
    %c0_52 = arith.constant 0 : index
    %c2_53 = arith.constant 2 : index
    %c0_54 = arith.constant 0 : index
    %c0_55 = arith.constant 0 : index
    %76 = vector.load %arg5[%c0_52, %c2_53, %c0_54, %c0_55] : memref<1x4x64x32xf32, #tpu.memory_space<vmem>>, vector<1x1x64x32xf32>
    %77 = vector.shape_cast %76 : vector<1x1x64x32xf32> to vector<64x32xf32>
    %78 = arith.truncf %77 : vector<64x32xf32> to vector<64x32xbf16>
    %cst_56 = arith.constant dense<0.000000e+00> : vector<64x64xf32>
    %79 = tpu.matmul %72, %75, %cst_56 {dimension_numbers = #tpu.dot_dimension_numbers<[1], [1], [0], [0], [0, 0, 1, 0], [], []>} : vector<64x32xbf16>, vector<64x32xbf16>, vector<64x64xf32> -> vector<64x64xf32>
    %80 = vector.broadcast %0 : f32 to vector<64x64xf32>
    %81 = arith.mulf %79, %80 : vector<64x64xf32>
    %cst_57 = arith.constant dense<0xFF800000> : vector<64xf32>
    %82 = vector.multi_reduction <maximumf>, %81, %cst_57 [1] : vector<64x64xf32> to vector<64xf32>
    %83 = vector.shape_cast %82 : vector<64xf32> to vector<64x1xf32>
    %84 = vector.broadcast %83 : vector<64x1xf32> to vector<64x64xf32>
    %85 = arith.subf %81, %84 : vector<64x64xf32>
    %86 = math.exp %85 : vector<64x64xf32>
    %cst_58 = arith.constant dense<0.000000e+00> : vector<64xf32>
    %87 = vector.multi_reduction <add>, %86, %cst_58 [1] : vector<64x64xf32> to vector<64xf32>
    %88 = vector.shape_cast %87 : vector<64xf32> to vector<64x1xf32>
    %89 = tpu.reciprocal %88 {approx = true} : vector<64x1xf32> -> vector<64x1xf32>
    %90 = vector.broadcast %89 : vector<64x1xf32> to vector<64x64xf32>
    %91 = arith.mulf %86, %90 : vector<64x64xf32>
    %c0_59 = arith.constant 0 : index
    %c2_60 = arith.constant 2 : index
    %c0_61 = arith.constant 0 : index
    %c0_62 = arith.constant 0 : index
    %92 = vector.load %arg6[%c0_59, %c2_60, %c0_61, %c0_62] : memref<1x4x64x64xf32, #tpu.memory_space<vmem>>, vector<1x1x64x64xf32>
    %93 = vector.shape_cast %92 : vector<1x1x64x64xf32> to vector<64x64xf32>
    %94 = vector.broadcast %1 : f32 to vector<64x64xf32>
    %95 = arith.cmpf oge, %93, %94 : vector<64x64xf32>
    %96 = vector.broadcast %5 : f32 to vector<64x64xf32>
    %97 = arith.mulf %91, %96 : vector<64x64xf32>
    %cst_63 = arith.constant 0.000000e+00 : f32
    %98 = vector.broadcast %cst_63 : f32 to vector<64x64xf32>
    %99 = arith.select %95, %97, %98 : vector<64x64xi1>, vector<64x64xf32>
    %100 = arith.truncf %99 : vector<64x64xf32> to vector<64x64xbf16>
    %cst_64 = arith.constant dense<0.000000e+00> : vector<64x32xf32>
    %101 = tpu.matmul %100, %78, %cst_64 {dimension_numbers = #tpu.dot_dimension_numbers<[1], [0], [0], [1], [0, 0, 1, 1], [], []>} : vector<64x64xbf16>, vector<64x32xbf16>, vector<64x32xf32> -> vector<64x32xf32>
    %c0_65 = arith.constant 0 : index
    %c3 = arith.constant 3 : index
    %c0_66 = arith.constant 0 : index
    %c0_67 = arith.constant 0 : index
    %102 = vector.load %arg3[%c0_65, %c3, %c0_66, %c0_67] : memref<1x4x64x32xf32, #tpu.memory_space<vmem>>, vector<1x1x64x32xf32>
    %103 = vector.shape_cast %102 : vector<1x1x64x32xf32> to vector<64x32xf32>
    %104 = arith.truncf %103 : vector<64x32xf32> to vector<64x32xbf16>
    %c0_68 = arith.constant 0 : index
    %c3_69 = arith.constant 3 : index
    %c0_70 = arith.constant 0 : index
    %c0_71 = arith.constant 0 : index
    %105 = vector.load %arg4[%c0_68, %c3_69, %c0_70, %c0_71] : memref<1x4x64x32xf32, #tpu.memory_space<vmem>>, vector<1x1x64x32xf32>
    %106 = vector.shape_cast %105 : vector<1x1x64x32xf32> to vector<64x32xf32>
    %107 = arith.truncf %106 : vector<64x32xf32> to vector<64x32xbf16>
    %c0_72 = arith.constant 0 : index
    %c3_73 = arith.constant 3 : index
    %c0_74 = arith.constant 0 : index
    %c0_75 = arith.constant 0 : index
    %108 = vector.load %arg5[%c0_72, %c3_73, %c0_74, %c0_75] : memref<1x4x64x32xf32, #tpu.memory_space<vmem>>, vector<1x1x64x32xf32>
    %109 = vector.shape_cast %108 : vector<1x1x64x32xf32> to vector<64x32xf32>
    %110 = arith.truncf %109 : vector<64x32xf32> to vector<64x32xbf16>
    %cst_76 = arith.constant dense<0.000000e+00> : vector<64x64xf32>
    %111 = tpu.matmul %104, %107, %cst_76 {dimension_numbers = #tpu.dot_dimension_numbers<[1], [1], [0], [0], [0, 0, 1, 0], [], []>} : vector<64x32xbf16>, vector<64x32xbf16>, vector<64x64xf32> -> vector<64x64xf32>
    %112 = vector.broadcast %0 : f32 to vector<64x64xf32>
    %113 = arith.mulf %111, %112 : vector<64x64xf32>
    %cst_77 = arith.constant dense<0xFF800000> : vector<64xf32>
    %114 = vector.multi_reduction <maximumf>, %113, %cst_77 [1] : vector<64x64xf32> to vector<64xf32>
    %115 = vector.shape_cast %114 : vector<64xf32> to vector<64x1xf32>
    %116 = vector.broadcast %115 : vector<64x1xf32> to vector<64x64xf32>
    %117 = arith.subf %113, %116 : vector<64x64xf32>
    %118 = math.exp %117 : vector<64x64xf32>
    %cst_78 = arith.constant dense<0.000000e+00> : vector<64xf32>
    %119 = vector.multi_reduction <add>, %118, %cst_78 [1] : vector<64x64xf32> to vector<64xf32>
    %120 = vector.shape_cast %119 : vector<64xf32> to vector<64x1xf32>
    %121 = tpu.reciprocal %120 {approx = true} : vector<64x1xf32> -> vector<64x1xf32>
    %122 = vector.broadcast %121 : vector<64x1xf32> to vector<64x64xf32>
    %123 = arith.mulf %118, %122 : vector<64x64xf32>
    %c0_79 = arith.constant 0 : index
    %c3_80 = arith.constant 3 : index
    %c0_81 = arith.constant 0 : index
    %c0_82 = arith.constant 0 : index
    %124 = vector.load %arg6[%c0_79, %c3_80, %c0_81, %c0_82] : memref<1x4x64x64xf32, #tpu.memory_space<vmem>>, vector<1x1x64x64xf32>
    %125 = vector.shape_cast %124 : vector<1x1x64x64xf32> to vector<64x64xf32>
    %126 = vector.broadcast %1 : f32 to vector<64x64xf32>
    %127 = arith.cmpf oge, %125, %126 : vector<64x64xf32>
    %128 = vector.broadcast %5 : f32 to vector<64x64xf32>
    %129 = arith.mulf %123, %128 : vector<64x64xf32>
    %cst_83 = arith.constant 0.000000e+00 : f32
    %130 = vector.broadcast %cst_83 : f32 to vector<64x64xf32>
    %131 = arith.select %127, %129, %130 : vector<64x64xi1>, vector<64x64xf32>
    %132 = arith.truncf %131 : vector<64x64xf32> to vector<64x64xbf16>
    %cst_84 = arith.constant dense<0.000000e+00> : vector<64x32xf32>
    %133 = tpu.matmul %132, %110, %cst_84 {dimension_numbers = #tpu.dot_dimension_numbers<[1], [0], [0], [1], [0, 0, 1, 1], [], []>} : vector<64x64xbf16>, vector<64x32xbf16>, vector<64x32xf32> -> vector<64x32xf32>
    %134 = tpu.concatenate %37, %69, %101, %133 in 1 : vector<64x32xf32>, vector<64x32xf32>, vector<64x32xf32>, vector<64x32xf32> -> vector<64x128xf32>
    %c0_85 = arith.constant 0 : index
    %c0_86 = arith.constant 0 : index
    %c0_87 = arith.constant 0 : index
    %135 = vector.load %arg7[%c0_85, %c0_86, %c0_87] : memref<1x64x128xf32, #tpu.memory_space<vmem>>, vector<1x64x128xf32>
    %136 = vector.shape_cast %135 : vector<1x64x128xf32> to vector<64x128xf32>
    %137 = vector.shape_cast %134 : vector<64x128xf32> to vector<1x64x128xf32>
    tpu.vector_store %arg7[%c0_85, %c0_86, %c0_87], %137 {strides = array<i32>} : memref<1x64x128xf32, #tpu.memory_space<vmem>>, vector<1x64x128xf32>,
    return
  }
  func.func @transform_0(%arg0: i32) -> i32 {
    %c0_i32 = arith.constant 0 : i32
    %c0_i32_0 = arith.constant 0 : i32
    return %c0_i32 : i32
  }
  func.func @transform_1(%arg0: i32) -> i32 {
    %c0_i32 = arith.constant 0 : i32
    %c0_i32_0 = arith.constant 0 : i32
    return %c0_i32 : i32
  }
  func.func @transform_2(%arg0: i32) -> (i32, i32, i32, i32) {
    %c0_i32 = arith.constant 0 : i32
    %c0_i32_0 = arith.constant 0 : i32
    %c0_i32_1 = arith.constant 0 : i32
    %c0_i32_2 = arith.constant 0 : i32
    return %arg0, %c0_i32, %c0_i32_0, %c0_i32_1 : i32, i32, i32, i32
  }
  func.func @transform_3(%arg0: i32) -> (i32, i32, i32, i32) {
    %c0_i32 = arith.constant 0 : i32
    %c0_i32_0 = arith.constant 0 : i32
    %c0_i32_1 = arith.constant 0 : i32
    %c0_i32_2 = arith.constant 0 : i32
    return %arg0, %c0_i32, %c0_i32_0, %c0_i32_1 : i32, i32, i32, i32
  }
  func.func @transform_4(%arg0: i32) -> (i32, i32, i32, i32) {
    %c0_i32 = arith.constant 0 : i32
    %c0_i32_0 = arith.constant 0 : i32
    %c0_i32_1 = arith.constant 0 : i32
    %c0_i32_2 = arith.constant 0 : i32
    return %arg0, %c0_i32, %c0_i32_0, %c0_i32_1 : i32, i32, i32, i32
  }
  func.func @transform_5(%arg0: i32) -> (i32, i32, i32, i32) {
    %c0_i32 = arith.constant 0 : i32
    %c0_i32_0 = arith.constant 0 : i32
    %c0_i32_1 = arith.constant 0 : i32
    %c0_i32_2 = arith.constant 0 : i32
    return %arg0, %c0_i32, %c0_i32_0, %c0_i32_1 : i32, i32, i32, i32
  }
  func.func @transform_6(%arg0: i32) -> (i32, i32, i32) {
    %c0_i32 = arith.constant 0 : i32
    %c0_i32_0 = arith.constant 0 : i32
    %c0_i32_1 = arith.constant 0 : i32
    return %arg0, %c0_i32, %c0_i32_0 : i32, i32, i32
  }
}

</mosaic_0001>

<llo_original>
// kernel: sdpa_dropout.1
$region0: #{sdpa_dropout.1}
  #allocation0 [shape = 'u32[]', space=smem, size = 0x4, offset = 0x4, fixed_abs, tag = 'smem constant byte address 0x4 - core index']
  #allocation1 [shape = 'u32[144,128]{1,0:T(1,128)}', space=vmem, size = 0x12000, scoped, tag = 'internal scratch']
  #allocation2 [shape = 'f32[1]{0:T(128)S(6)}', space=smem, size = 0x200, scoped, tag = 'scoped memory for sdpa_dropout.1']
  #allocation3 [shape = 'f32[1]{0:T(128)S(6)}', space=smem, size = 0x200, scoped, tag = 'scoped memory for sdpa_dropout.1']
  %s0 = inlined_call_operand.<no memory space> [shape: f32[1], index: 0, kind: input, shape index: {}]
  %s1 = inlined_call_operand.<no memory space> [shape: f32[1], index: 1, kind: input, shape index: {}]
  %s2 = inlined_call_operand.vmem [shape: f32[2,4,64,32], index: 2, kind: input, shape index: {}]
  %s3 = inlined_call_operand.vmem [shape: f32[2,4,64,32], index: 3, kind: input, shape index: {}]
  %s4 = inlined_call_operand.vmem [shape: f32[2,4,64,32], index: 4, kind: input, shape index: {}]
  %s5 = inlined_call_operand.vmem [shape: f32[2,4,64,64], index: 5, kind: input, shape index: {}]
  %s6 = inlined_call_operand.vmem [shape: f32[2,64,128], index: 6, kind: output, shape index: {}]
  %s7 = sld [smem:[#allocation0]]
  $region57: #{sdpa_dropout.1} parent=0
    _
  %s9 = ssub.s32 1, %s7
  %s10 = scalar_select 0, %s9, %s7
  %11 = sst [smem:[#allocation2]] %s0
  %12 = sst [smem:[#allocation3]] %s1
  loop: start=0, step=1, limit=4
  $region2: #{sdpa_dropout.1} parent=0 // loop_pre_header
    _
  $region3: #{sdpa_dropout.1} parent=0 // loop_header
    %s14 = sphi 0, %s18
    %p15 = scmp.ge.s32.totalorder %s14, 4
    %s22 = sphi 0, %s22
    %s24 = sphi 0, %s22
    %s25 = sphi 0, %s24
    %s39 = sphi 0, %s25
    %s43 = sphi 0, %s43
    %s45 = sphi 0, %s43
    %s46 = sphi 0, %s45
    %s60 = sphi 0, %s46
    %s66 = sphi 0, %s68
    %s69 = sphi 0, %s66
    %s70 = sphi 0, %s69
    %s86 = sphi 0, %s70
    %s92 = sphi 0, %s94
    %s95 = sphi 0, %s92
    %s96 = sphi 0, %s95
    %s112 = sphi 0, %s96
    %s118 = sphi 0, %s120
    %s121 = sphi 0, %s118
    %s122 = sphi 0, %s121
    %s138 = sphi 0, %s122
    %s144 = sphi 0, %s146
    %s147 = sphi 0, %s144
    %s148 = sphi 0, %s147
    %s164 = sphi 0, %s148
    %s170 = sphi 0, %s172
    %s173 = sphi 0, %s170
    %s174 = sphi 0, %s173
    %s190 = sphi 0, %s174
  $region4: #{sdpa_dropout.1} parent=0 // loop_header_branch
    %17 = sbr.rel (%p15) target = $region8
  $region5: #{sdpa_dropout.1} parent=0 // loop_body
    %s19 = ssub.s32 %s14, 1
    %s20 = ssub.s32 %s14, 2
    %s21 = sadd.s32 %s14, 1
    %s23 = sadd.s32 %s22, 1
    %p26 = scmp.eq.s32.totalorder %s14, 1
    %p27 = scmp.ne.s32.totalorder %s22, %s24
    %p28 = scmp.eq.s32.totalorder %s14, 0
    %p29 = por %p27, %p28
    %p30 = scmp.ne.s32.totalorder %s22, %s24
    %p31 = scmp.eq.s32.totalorder %s19, 1
    %p32 = por %p30, %p31
    %p33 = scmp.ne.s32.totalorder %s24, %s25
    %p34 = scmp.eq.s32.totalorder %s19, 0
    %p35 = por %p33, %p34
    %p36 = scmp.ne.s32.totalorder %s24, %s25
    %p37 = scmp.eq.s32.totalorder %s20, 1
    %p38 = por %p36, %p37
    %p40 = scmp.ne.s32.totalorder %s25, %s39
    %p41 = scmp.eq.s32.totalorder %s20, 0
    %p42 = por %p40, %p41
    %s44 = sadd.s32 %s43, 1
    %p47 = scmp.eq.s32.totalorder %s14, 1
    %p48 = scmp.ne.s32.totalorder %s43, %s45
    %p49 = scmp.eq.s32.totalorder %s14, 0
    %p50 = por %p48, %p49
    %p51 = scmp.ne.s32.totalorder %s43, %s45
    %p52 = scmp.eq.s32.totalorder %s19, 1
    %p53 = por %p51, %p52
    %p54 = scmp.ne.s32.totalorder %s45, %s46
    %p55 = scmp.eq.s32.totalorder %s19, 0
    %p56 = por %p54, %p55
    %p57 = scmp.ne.s32.totalorder %s45, %s46
    %p58 = scmp.eq.s32.totalorder %s20, 1
    %p59 = por %p57, %p58
    %p61 = scmp.ne.s32.totalorder %s46, %s60
    %p62 = scmp.eq.s32.totalorder %s20, 0
    %p63 = por %p61, %p62
    %s64 = ssub.s32 %s14, %s21
    %p65 = scmp.eq.s32.totalorder %s64, 0
    %s67 = sadd.s32 %s66, 1
    %s68 = scalar_select %p65, %s66, %s67
    %p71 = pneg %p65
    %p72 = scmp.eq.s32.totalorder %s14, 1
    %p73 = por %p71, %p72
    %p74 = scmp.ne.s32.totalorder %s66, %s69
    %p75 = scmp.eq.s32.totalorder %s14, 0
    %p76 = por %p74, %p75
    %p77 = scmp.ne.s32.totalorder %s66, %s69
    %p78 = scmp.eq.s32.totalorder %s19, 1
    %p79 = por %p77, %p78
    %p80 = scmp.ne.s32.totalorder %s69, %s70
    %p81 = scmp.eq.s32.totalorder %s19, 0
    %p82 = por %p80, %p81
    %p83 = scmp.ne.s32.totalorder %s69, %s70
    %p84 = scmp.eq.s32.totalorder %s20, 1
    %p85 = por %p83, %p84
    %p87 = scmp.ne.s32.totalorder %s70, %s86
    %p88 = scmp.eq.s32.totalorder %s20, 0
    %p89 = por %p87, %p88
    %s90 = ssub.s32 %s14, %s21
    %p91 = scmp.eq.s32.totalorder %s90, 0
    %s93 = sadd.s32 %s92, 1
    %s94 = scalar_select %p91, %s92, %s93
    %p97 = pneg %p91
    %p98 = scmp.eq.s32.totalorder %s14, 1
    %p99 = por %p97, %p98
    %p100 = scmp.ne.s32.totalorder %s92, %s95
    %p101 = scmp.eq.s32.totalorder %s14, 0
    %p102 = por %p100, %p101
    %p103 = scmp.ne.s32.totalorder %s92, %s95
    %p104 = scmp.eq.s32.totalorder %s19, 1
    %p105 = por %p103, %p104
    %p106 = scmp.ne.s32.totalorder %s95, %s96
    %p107 = scmp.eq.s32.totalorder %s19, 0
    %p108 = por %p106, %p107
    %p109 = scmp.ne.s32.totalorder %s95, %s96
    %p110 = scmp.eq.s32.totalorder %s20, 1
    %p111 = por %p109, %p110
    %p113 = scmp.ne.s32.totalorder %s96, %s112
    %p114 = scmp.eq.s32.totalorder %s20, 0
    %p115 = por %p113, %p114
    %s116 = ssub.s32 %s14, %s21
    %p117 = scmp.eq.s32.totalorder %s116, 0
    %s119 = sadd.s32 %s118, 1
    %s120 = scalar_select %p117, %s118, %s119
    %p123 = pneg %p117
    %p124 = scmp.eq.s32.totalorder %s14, 1
    %p125 = por %p123, %p124
    %p126 = scmp.ne.s32.totalorder %s118, %s121
    %p127 = scmp.eq.s32.totalorder %s14, 0
    %p128 = por %p126, %p127
    %p129 = scmp.ne.s32.totalorder %s118, %s121
    %p130 = scmp.eq.s32.totalorder %s19, 1
    %p131 = por %p129, %p130
    %p132 = scmp.ne.s32.totalorder %s121, %s122
    %p133 = scmp.eq.s32.totalorder %s19, 0
    %p134 = por %p132, %p133
    %p135 = scmp.ne.s32.totalorder %s121, %s122
    %p136 = scmp.eq.s32.totalorder %s20, 1
    %p137 = por %p135, %p136
    %p139 = scmp.ne.s32.totalorder %s122, %s138
    %p140 = scmp.eq.s32.totalorder %s20, 0
    %p141 = por %p139, %p140
    %s142 = ssub.s32 %s14, %s21
    %p143 = scmp.eq.s32.totalorder %s142, 0
    %s145 = sadd.s32 %s144, 1
    %s146 = scalar_select %p143, %s144, %s145
    %p149 = pneg %p143
    %p150 = scmp.eq.s32.totalorder %s14, 1
    %p151 = por %p149, %p150
    %p152 = scmp.ne.s32.totalorder %s144, %s147
    %p153 = scmp.eq.s32.totalorder %s14, 0
    %p154 = por %p152, %p153
    %p155 = scmp.ne.s32.totalorder %s144, %s147
    %p156 = scmp.eq.s32.totalorder %s19, 1
    %p157 = por %p155, %p156
    %p158 = scmp.ne.s32.totalorder %s147, %s148
    %p159 = scmp.eq.s32.totalorder %s19, 0
    %p160 = por %p158, %p159
    %p161 = scmp.ne.s32.totalorder %s147, %s148
    %p162 = scmp.eq.s32.totalorder %s20, 1
    %p163 = por %p161, %p162
    %p165 = scmp.ne.s32.totalorder %s148, %s164
    %p166 = scmp.eq.s32.totalorder %s20, 0
    %p167 = por %p165, %p166
    %s168 = ssub.s32 %s14, %s21
    %p169 = scmp.eq.s32.totalorder %s168, 0
    %s171 = sadd.s32 %s170, 1
    %s172 = scalar_select %p169, %s170, %s171
    %p175 = pneg %p169
    %p176 = scmp.eq.s32.totalorder %s14, 1
    %p177 = por %p175, %p176
    %p178 = scmp.ne.s32.totalorder %s170, %s173
    %p179 = scmp.eq.s32.totalorder %s14, 0
    %p180 = por %p178, %p179
    %p181 = scmp.ne.s32.totalorder %s170, %s173
    %p182 = scmp.eq.s32.totalorder %s19, 1
    %p183 = por %p181, %p182
    %p184 = scmp.ne.s32.totalorder %s173, %s174
    %p185 = scmp.eq.s32.totalorder %s19, 0
    %p186 = por %p184, %p185
    %p187 = scmp.ne.s32.totalorder %s173, %s174
    %p188 = scmp.eq.s32.totalorder %s20, 1
    %p189 = por %p187, %p188
    %p191 = scmp.ne.s32.totalorder %s174, %s190
    %p192 = scmp.eq.s32.totalorder %s20, 0
    %p193 = por %p191, %p192
    %p194 = scmp.le.s32.totalorder 1, %s14
    %p195 = scmp.lt.s32.totalorder %s14, 3
    %p196 = pnand %p194, %p195
    %p197 = pneg %p196
    // Predicated region
    $region9: #{sdpa_dropout.1} parent=5 // pred_check
      _
    $region10: #{sdpa_dropout.1} parent=5 // pred_check_branch
      %199 = sbr.rel (%p196) target = $region12
    $region11: #{sdpa_dropout.1} parent=5 // pred_region
      %s200 = ssub.s32 %s14, 1
      // Predicated region
      $region13: #{sdpa_dropout.1} parent=11 // pred_check
        %p201 = pneg %p35
      $region14: #{sdpa_dropout.1} parent=11 // pred_check_branch
        %203 = sbr.rel (%p201) target = $region16
      $region15: #{sdpa_dropout.1} parent=11 // pred_region
        _
      $region16: #{sdpa_dropout.1} parent=11 // pred_fallthru
        _
      // Predicated region
      $region17: #{sdpa_dropout.1} parent=11 // pred_check
        %p204 = pneg %p56
      $region18: #{sdpa_dropout.1} parent=11 // pred_check_branch
        %206 = sbr.rel (%p204) target = $region20
      $region19: #{sdpa_dropout.1} parent=11 // pred_region
        _
      $region20: #{sdpa_dropout.1} parent=11 // pred_fallthru
        _
    $region12: #{sdpa_dropout.1} parent=5 // pred_fallthru
      _
    %p207 = scmp.lt.s32.totalorder %s14, 2
    // Predicated region
    $region21: #{sdpa_dropout.1} parent=5 // pred_check
      %p208 = pneg %p207
    $region22: #{sdpa_dropout.1} parent=5 // pred_check_branch
      %210 = sbr.rel (%p208) target = $region24
    $region23: #{sdpa_dropout.1} parent=5 // pred_region
      // Predicated region
      $region25: #{sdpa_dropout.1} parent=23 // pred_check
        %p211 = pneg %p76
      $region26: #{sdpa_dropout.1} parent=23 // pred_check_branch
        %213 = sbr.rel (%p211) target = $region28
      $region27: #{sdpa_dropout.1} parent=23 // pred_region
        %p214 = scmp.lt.s32.totalorder %s14, 1
        %s215 = scalar_select %p214, %s14, 1
        %s216 = smul.addr %s215, 32
        %s217 = smul.addr %s216, 8
        %s218 = scalar_lea.vmem %s2, %s217
      $region28: #{sdpa_dropout.1} parent=23 // pred_fallthru
        _
      // Predicated region
      $region29: #{sdpa_dropout.1} parent=23 // pred_check
        %p219 = pneg %p102
      $region30: #{sdpa_dropout.1} parent=23 // pred_check_branch
        %221 = sbr.rel (%p219) target = $region32
      $region31: #{sdpa_dropout.1} parent=23 // pred_region
        %p222 = scmp.lt.s32.totalorder %s14, 1
        %s223 = scalar_select %p222, %s14, 1
        %s224 = smul.addr %s223, 32
        %s225 = smul.addr %s224, 8
        %s226 = scalar_lea.vmem %s3, %s225
      $region32: #{sdpa_dropout.1} parent=23 // pred_fallthru
        _
      // Predicated region
      $region33: #{sdpa_dropout.1} parent=23 // pred_check
        %p227 = pneg %p128
      $region34: #{sdpa_dropout.1} parent=23 // pred_check_branch
        %229 = sbr.rel (%p227) target = $region36
      $region35: #{sdpa_dropout.1} parent=23 // pred_region
        %p230 = scmp.lt.s32.totalorder %s14, 1
        %s231 = scalar_select %p230, %s14, 1
        %s232 = smul.addr %s231, 32
        %s233 = smul.addr %s232, 8
        %s234 = scalar_lea.vmem %s4, %s233
      $region36: #{sdpa_dropout.1} parent=23 // pred_fallthru
        _
      // Predicated region
      $region37: #{sdpa_dropout.1} parent=23 // pred_check
        %p235 = pneg %p154
      $region38: #{sdpa_dropout.1} parent=23 // pred_check_branch
        %237 = sbr.rel (%p235) target = $region40
      $region39: #{sdpa_dropout.1} parent=23 // pred_region
        %p238 = scmp.lt.s32.totalorder %s14, 1
        %s239 = scalar_select %p238, %s14, 1
        %s240 = smul.addr %s239, 32
        %s241 = smul.addr %s240, 8
        %s242 = scalar_lea.vmem %s5, %s241
      $region40: #{sdpa_dropout.1} parent=23 // pred_fallthru
        _
    $region24: #{sdpa_dropout.1} parent=5 // pred_fallthru
      _
    %p243 = scmp.le.s32.totalorder 1, %s14
    %p244 = scmp.lt.s32.totalorder %s14, 3
    %p245 = pnand %p243, %p244
    %p246 = pneg %p245
    // Predicated region
    $region41: #{sdpa_dropout.1} parent=5 // pred_check
      _
    $region42: #{sdpa_dropout.1} parent=5 // pred_check_branch
      %248 = sbr.rel (%p245) target = $region44
    $region43: #{sdpa_dropout.1} parent=5 // pred_region
      %s249 = ssub.s32 %s14, 1
      %p250 = pneg %p35
      %p251 = pneg %p32
      %p252 = pneg %p56
      %p253 = pneg %p53
      %p254 = scmp.lt.s32.totalorder %s19, 1
      %s255 = scalar_select %p254, %s19, 1
      %s256 = smul.addr %s255, 32
      %s257 = smul.addr %s256, 8
      %s258 = scalar_lea.vmem %s2, %s257
      %p259 = pneg %p82
      %p260 = pneg %p79
      %p261 = scmp.lt.s32.totalorder %s19, 1
      %s262 = scalar_select %p261, %s19, 1
      %s263 = smul.addr %s262, 32
      %s264 = smul.addr %s263, 8
      %s265 = scalar_lea.vmem %s3, %s264
      %p266 = pneg %p108
      %p267 = pneg %p105
      %p268 = scmp.lt.s32.totalorder %s19, 1
      %s269 = scalar_select %p268, %s19, 1
      %s270 = smul.addr %s269, 32
      %s271 = smul.addr %s270, 8
      %s272 = scalar_lea.vmem %s4, %s271
      %p273 = pneg %p134
      %p274 = pneg %p131
      %p275 = scmp.lt.s32.totalorder %s19, 1
      %s276 = scalar_select %p275, %s19, 1
      %s277 = smul.addr %s276, 32
      %s278 = smul.addr %s277, 8
      %s279 = scalar_lea.vmem %s5, %s278
      %p280 = pneg %p160
      %p281 = pneg %p157
      %p282 = pneg %p186
      %p283 = pneg %p183
      %p284 = scmp.lt.s32.totalorder %s19, 1
      %s285 = scalar_select %p284, %s19, 1
      %s286 = smul.addr %s285, 8
      %s287 = smul.addr %s286, 8
      %s288 = scalar_lea.vmem %s6, %s287
      %p289 = scmp.lt.s32.totalorder %s19, 1
      %s290 = scalar_select %p289, %s19, 1
      %s291 = smul.addr %s290, 32
      %s292 = smul.addr %s291, 8
      %s293 = scalar_lea.vmem %s2, %s292
      %p294 = scmp.lt.s32.totalorder %s19, 1
      %s295 = scalar_select %p294, %s19, 1
      %s296 = smul.addr %s295, 32
      %s297 = smul.addr %s296, 8
      %s298 = scalar_lea.vmem %s3, %s297
      %p299 = scmp.lt.s32.totalorder %s19, 1
      %s300 = scalar_select %p299, %s19, 1
      %s301 = smul.addr %s300, 32
      %s302 = smul.addr %s301, 8
      %s303 = scalar_lea.vmem %s4, %s302
      %p304 = scmp.lt.s32.totalorder %s19, 1
      %s305 = scalar_select %p304, %s19, 1
      %s306 = smul.addr %s305, 32
      %s307 = smul.addr %s306, 8
      %s308 = scalar_lea.vmem %s5, %s307
      %p309 = scmp.lt.s32.totalorder %s19, 1
      %s310 = scalar_select %p309, %s19, 1
      %s311 = smul.addr %s310, 8
      %s312 = smul.addr %s311, 8
      %s313 = scalar_lea.vmem %s6, %s312
      %s315 = sld [smem:[#allocation2]]
      %s316 = sld [smem:[#allocation3]]
      %p317 = scmp.lt.f32.partialorder %s316, 1.0
      %s318 = ssub.f32 1.0, %s316
      %v319 = vstv %s318
      %v320 = vrcp.pop %v319
      %s321 = vtos %v320
      %s322 = scalar_select %p317, %s321, 0.0
      %v323 = vld [vmem:[%s293] sm:$0xff]
      %v324 = vld [vmem:[%s293 + $0x8] sm:$0xff]
      %v325 = vld [vmem:[%s293 + $0x10] sm:$0xff]
      %v326 = vld [vmem:[%s293 + $0x18] sm:$0xff]
      %v327 = vld [vmem:[%s293 + $0x20] sm:$0xff]
      %v328 = vld [vmem:[%s293 + $0x28] sm:$0xff]
      %v329 = vld [vmem:[%s293 + $0x30] sm:$0xff]
      %v330 = vld [vmem:[%s293 + $0x38] sm:$0xff]
      %v331 = vpack.c.bf16 %v324, %v323
      %v332 = vpack.c.bf16 %v326, %v325
      %v333 = vpack.c.bf16 %v328, %v327
      %v334 = vpack.c.bf16 %v330, %v329
      %v335 = vld [vmem:[%s298] sm:$0xff]
      %v336 = vld [vmem:[%s298 + $0x8] sm:$0xff]
      %v337 = vld [vmem:[%s298 + $0x10] sm:$0xff]
      %v338 = vld [vmem:[%s298 + $0x18] sm:$0xff]
      %v339 = vld [vmem:[%s298 + $0x20] sm:$0xff]
      %v340 = vld [vmem:[%s298 + $0x28] sm:$0xff]
      %v341 = vld [vmem:[%s298 + $0x30] sm:$0xff]
      %v342 = vld [vmem:[%s298 + $0x38] sm:$0xff]
      %v343 = vpack.c.bf16 %v336, %v335
      %v344 = vpack.c.bf16 %v338, %v337
      %v345 = vpack.c.bf16 %v340, %v339
      %v346 = vpack.c.bf16 %v342, %v341
      %v347 = vld [vmem:[%s303] sm:$0xff]
      %v348 = vld [vmem:[%s303 + $0x8] sm:$0xff]
      %v349 = vld [vmem:[%s303 + $0x10] sm:$0xff]
      %v350 = vld [vmem:[%s303 + $0x18] sm:$0xff]
      %v351 = vld [vmem:[%s303 + $0x20] sm:$0xff]
      %v352 = vld [vmem:[%s303 + $0x28] sm:$0xff]
      %v353 = vld [vmem:[%s303 + $0x30] sm:$0xff]
      %v354 = vld [vmem:[%s303 + $0x38] sm:$0xff]
      %v355 = vpack.c.bf16 %v348, %v347
      %v356 = vpack.c.bf16 %v350, %v349
      %v357 = vpack.c.bf16 %v352, %v351
      %v358 = vpack.c.bf16 %v354, %v353
      %vm359 = vcmask 261120
      %v361 = vsel %vm359, %v331, 0
      %v364 = vsel %vm359, %v332, 0
      %v367 = vsel %vm359, %v333, 0
      %v370 = vsel %vm359, %v334, 0
      %v373 = vsel %vm359, %v343, 0
      %v376 = vsel %vm359, %v344, 0
      %v379 = vsel %vm359, %v345, 0
      %v382 = vsel %vm359, %v346, 0
      %384 = vmatprep.subr.bf16.mxu0 0
      %385 = vmatpush1.bf16.xpose.msra.mxu0 0
      %386 = vmatprep.subr.bf16.mxu0 0
      %387 = vmatpush1.bf16.xpose.msra.mxu0 0
      %388 = vmatprep.subr.bf16.mxu0 0
      %389 = vmatpush1.bf16.xpose.msra.mxu0 0
      %390 = vmatprep.subr.bf16.mxu0 0
      %391 = vmatpush1.bf16.xpose.msra.mxu0 0
      %392 = vmatprep.subr.bf16.mxu0 0
      %393 = vmatpush1.bf16.xpose.msra.mxu0 %v382
      %394 = vmatprep.subr.bf16.mxu0 0
      %395 = vmatpush1.bf16.xpose.msra.mxu0 %v379
      %396 = vmatprep.subr.bf16.mxu0 0
      %397 = vmatpush1.bf16.xpose.msra.mxu0 %v376
      %398 = vmatprep.subr.bf16.mxu0 0
      %399 = vmatpush1.bf16.xpose.msra.mxu0 %v373
      %400 = vmatprep.subr.bf16.mxu0 0
      %401 = vmatpush2.bf16.xpose.msra.mxu0 0
      %402 = vmatprep.subr.bf16.mxu0 0
      %403 = vmatpush2.bf16.xpose.msra.mxu0 0
      %404 = vmatprep.subr.bf16.mxu0 0
      %405 = vmatpush2.bf16.xpose.msra.mxu0 0
      %406 = vmatprep.subr.bf16.mxu0 0
      %407 = vmatpush2.bf16.xpose.msra.mxu0 0
      %408 = vmatprep.subr.bf16.mxu0 0
      %409 = vmatpush2.bf16.xpose.msra.mxu0 0
      %410 = vmatprep.subr.bf16.mxu0 0
      %411 = vmatpush2.bf16.xpose.msra.mxu0 0
      %412 = vmatprep.subr.bf16.mxu0 0
      %413 = vmatpush2.bf16.xpose.msra.mxu0 0
      %414 = vmatprep.subr.bf16.mxu0 0
      %415 = vmatpush2.bf16.xpose.msra.mxu0 0
      %416 = vmatprep.mubr.bf16.mxu0 0
      %417 = vmatmul.mubr.bf16.gmra.mxu0 %v361
      %v418 = vpop.f32.mrf.mxu0
      %v419 = vadd.f32 0.0, %v418
      %v420 = vpop.f32.mrf.mxu0
      %v421 = vpop.f32.mrf.mxu0
      %v422 = vadd.f32 0.0, %v421
      %v423 = vpop.f32.mrf.mxu0
      %424 = vmatprep.mubr.bf16.mxu0 0
      %425 = vmatmul.mubr.bf16.gmra.mxu0 %v364
      %v426 = vpop.f32.mrf.mxu0
      %v427 = vadd.f32 0.0, %v426
      %v428 = vpop.f32.mrf.mxu0
      %v429 = vpop.f32.mrf.mxu0
      %v430 = vadd.f32 0.0, %v429
      %v431 = vpop.f32.mrf.mxu0
      %432 = vmatprep.mubr.bf16.mxu0 0
      %433 = vmatmul.mubr.bf16.gmra.mxu0 %v367
      %v434 = vpop.f32.mrf.mxu0
      %v435 = vadd.f32 0.0, %v434
      %v436 = vpop.f32.mrf.mxu0
      %v437 = vpop.f32.mrf.mxu0
      %v438 = vadd.f32 0.0, %v437
      %v439 = vpop.f32.mrf.mxu0
      %440 = vmatprep.mubr.bf16.mxu0 0
      %441 = vmatmul.mubr.bf16.gmra.mxu0 %v370
      %v442 = vpop.f32.mrf.mxu0
      %v443 = vadd.f32 0.0, %v442
      %v444 = vpop.f32.mrf.mxu0
      %v445 = vpop.f32.mrf.mxu0
      %v446 = vadd.f32 0.0, %v445
      %v447 = vpop.f32.mrf.mxu0
      %448 = vdwg.mxu0
      %v449 = vstv %s315
      %v450 = vmul.f32 %v419, %v449
      %v451 = vmul.f32 %v422, %v449
      %v452 = vmul.f32 %v427, %v449
      %v453 = vmul.f32 %v430, %v449
      %v454 = vmul.f32 %v435, %v449
      %v455 = vmul.f32 %v438, %v449
      %v456 = vmul.f32 %v443, %v449
      %v457 = vmul.f32 %v446, %v449
      %vm458 = vcmask 523264
      %v459 = vsel %vm458, %v450, -inf
      %460 = vmax.xlane.f32.xlu0 %v459
      %v461 = vpop.xlane.xlu0 %460
      %v462 = vsel %vm458, %v451, -inf
      %463 = vmax.xlane.f32.xlu0 %v462
      %v464 = vpop.xlane.xlu0 %463
      %v465 = vsel %vm458, %v452, -inf
      %466 = vmax.xlane.f32.xlu0 %v465
      %v467 = vpop.xlane.xlu0 %466
      %v468 = vsel %vm458, %v453, -inf
      %469 = vmax.xlane.f32.xlu0 %v468
      %v470 = vpop.xlane.xlu0 %469
      %v471 = vsel %vm458, %v454, -inf
      %472 = vmax.xlane.f32.xlu0 %v471
      %v473 = vpop.xlane.xlu0 %472
      %v474 = vsel %vm458, %v455, -inf
      %475 = vmax.xlane.f32.xlu0 %v474
      %v476 = vpop.xlane.xlu0 %475
      %v477 = vsel %vm458, %v456, -inf
      %478 = vmax.xlane.f32.xlu0 %v477
      %v479 = vpop.xlane.xlu0 %478
      %v480 = vsel %vm458, %v457, -inf
      %481 = vmax.xlane.f32.xlu0 %v480
      %v482 = vpop.xlane.xlu0 %481
      %v483 = vsub.f32 %v450, %v461
      %v484 = vsub.f32 %v451, %v464
      %v485 = vsub.f32 %v452, %v467
      %v486 = vsub.f32 %v453, %v470
      %v487 = vsub.f32 %v454, %v473
      %v488 = vsub.f32 %v455, %v476
      %v489 = vsub.f32 %v456, %v479
      %v490 = vsub.f32 %v457, %v482
      %v491 = vmul.f32 %v483, 1.442695
      %v492 = vpow.pop %v491
      %v493 = vmul.f32 %v484, 1.442695
      %v494 = vpow.pop %v493
      %v495 = vmul.f32 %v485, 1.442695
      %v496 = vpow.pop %v495
      %v497 = vmul.f32 %v486, 1.442695
      %v498 = vpow.pop %v497
      %v499 = vmul.f32 %v487, 1.442695
      %v500 = vpow.pop %v499
      %v501 = vmul.f32 %v488, 1.442695
      %v502 = vpow.pop %v501
      %v503 = vmul.f32 %v489, 1.442695
      %v504 = vpow.pop %v503
      %v505 = vmul.f32 %v490, 1.442695
      %v506 = vpow.pop %v505
      %v507 = vsel %vm458, %v492, 0.0
      %508 = vadd.xlane.f32.xlu0 %v507
      %v509 = vpop.xlane.xlu0 %508
      %v510 = vsel %vm458, %v494, 0.0
      %511 = vadd.xlane.f32.xlu0 %v510
      %v512 = vpop.xlane.xlu0 %511
      %v513 = vsel %vm458, %v496, 0.0
      %514 = vadd.xlane.f32.xlu0 %v513
      %v515 = vpop.xlane.xlu0 %514
      %v516 = vsel %vm458, %v498, 0.0
      %517 = vadd.xlane.f32.xlu0 %v516
      %v518 = vpop.xlane.xlu0 %517
      %v519 = vsel %vm458, %v500, 0.0
      %520 = vadd.xlane.f32.xlu0 %v519
      %v521 = vpop.xlane.xlu0 %520
      %v522 = vsel %vm458, %v502, 0.0
      %523 = vadd.xlane.f32.xlu0 %v522
      %v524 = vpop.xlane.xlu0 %523
      %v525 = vsel %vm458, %v504, 0.0
      %526 = vadd.xlane.f32.xlu0 %v525
      %v527 = vpop.xlane.xlu0 %526
      %v528 = vsel %vm458, %v506, 0.0
      %529 = vadd.xlane.f32.xlu0 %v528
      %v530 = vpop.xlane.xlu0 %529
      %v531 = vrcp.pop %v509
      %v532 = vrcp.pop %v512
      %v533 = vrcp.pop %v515
      %v534 = vrcp.pop %v518
      %v535 = vrcp.pop %v521
      %v536 = vrcp.pop %v524
      %v537 = vrcp.pop %v527
      %v538 = vrcp.pop %v530
      %v539 = vmul.f32 %v492, %v531
      %v540 = vmul.f32 %v494, %v532
      %v541 = vmul.f32 %v496, %v533
      %v542 = vmul.f32 %v498, %v534
      %v543 = vmul.f32 %v500, %v535
      %v544 = vmul.f32 %v502, %v536
      %v545 = vmul.f32 %v504, %v537
      %v546 = vmul.f32 %v506, %v538
      %v547 = vld [vmem:[%s308] sm:$0xff]
      %v548 = vld [vmem:[%s308 + $0x8] sm:$0xff]
      %v549 = vld [vmem:[%s308 + $0x10] sm:$0xff]
      %v550 = vld [vmem:[%s308 + $0x18] sm:$0xff]
      %v551 = vld [vmem:[%s308 + $0x20] sm:$0xff]
      %v552 = vld [vmem:[%s308 + $0x28] sm:$0xff]
      %v553 = vld [vmem:[%s308 + $0x30] sm:$0xff]
      %v554 = vld [vmem:[%s308 + $0x38] sm:$0xff]
      %v555 = vstv %s316
      %vm556 = vcmp.ge.f32.partialorder %v547, %v555
      %vm557 = vcmp.ge.f32.partialorder %v548, %v555
      %vm558 = vcmp.ge.f32.partialorder %v549, %v555
      %vm559 = vcmp.ge.f32.partialorder %v550, %v555
      %vm560 = vcmp.ge.f32.partialorder %v551, %v555
      %vm561 = vcmp.ge.f32.partialorder %v552, %v555
      %vm562 = vcmp.ge.f32.partialorder %v553, %v555
      %vm563 = vcmp.ge.f32.partialorder %v554, %v555
      %v564 = vstv %s322
      %v565 = vmul.f32 %v539, %v564
      %v566 = vmul.f32 %v540, %v564
      %v567 = vmul.f32 %v541, %v564
      %v568 = vmul.f32 %v542, %v564
      %v569 = vmul.f32 %v543, %v564
      %v570 = vmul.f32 %v544, %v564
      %v571 = vmul.f32 %v545, %v564
      %v572 = vmul.f32 %v546, %v564
      %v573 = vsel %vm556, %v565, 0.0
      %v574 = vsel %vm557, %v566, 0.0
      %v575 = vsel %vm558, %v567, 0.0
      %v576 = vsel %vm559, %v568, 0.0
      %v577 = vsel %vm560, %v569, 0.0
      %v578 = vsel %vm561, %v570, 0.0
      %v579 = vsel %vm562, %v571, 0.0
      %v580 = vsel %vm563, %v572, 0.0
      %v581 = vpack.c.bf16 %v574, %v573
      %v582 = vpack.c.bf16 %v576, %v575
      %v583 = vpack.c.bf16 %v578, %v577
      %v584 = vpack.c.bf16 %v580, %v579
      %v586 = vsel %vm458, %v581, 0
      %v589 = vsel %vm458, %v582, 0
      %v592 = vsel %vm458, %v583, 0
      %v595 = vsel %vm458, %v584, 0
      %597 = vmatprep.subr.bf16.mxu0 0
      %598 = vmatpush1.bf16.msra.mxu0 0
      %599 = vmatprep.subr.bf16.mxu0 0
      %600 = vmatpush1.bf16.msra.mxu0 0
      %601 = vmatprep.subr.bf16.mxu0 0
      %602 = vmatpush1.bf16.msra.mxu0 0
      %603 = vmatprep.subr.bf16.mxu0 0
      %604 = vmatpush1.bf16.msra.mxu0 0
      %605 = vmatprep.subr.bf16.mxu0 0
      %606 = vmatpush1.bf16.msra.mxu0 %v358
      %607 = vmatprep.subr.bf16.mxu0 0
      %608 = vmatpush1.bf16.msra.mxu0 %v357
      %609 = vmatprep.subr.bf16.mxu0 0
      %610 = vmatpush1.bf16.msra.mxu0 %v356
      %611 = vmatprep.subr.bf16.mxu0 0
      %612 = vmatpush1.bf16.msra.mxu0 %v355
      %613 = vmatprep.subr.bf16.mxu0 0
      %614 = vmatpush2.bf16.msra.mxu0 0
      %615 = vmatprep.subr.bf16.mxu0 0
      %616 = vmatpush2.bf16.msra.mxu0 0
      %617 = vmatprep.subr.bf16.mxu0 0
      %618 = vmatpush2.bf16.msra.mxu0 0
      %619 = vmatprep.subr.bf16.mxu0 0
      %620 = vmatpush2.bf16.msra.mxu0 0
      %621 = vmatprep.subr.bf16.mxu0 0
      %622 = vmatpush2.bf16.msra.mxu0 0
      %623 = vmatprep.subr.bf16.mxu0 0
      %624 = vmatpush2.bf16.msra.mxu0 0
      %625 = vmatprep.subr.bf16.mxu0 0
      %626 = vmatpush2.bf16.msra.mxu0 0
      %627 = vmatprep.subr.bf16.mxu0 0
      %628 = vmatpush2.bf16.msra.mxu0 0
      %629 = vmatprep.mubr.bf16.mxu0 0
      %630 = vmatmul.mubr.bf16.gmra.mxu0 %v586
      %v631 = vpop.f32.mrf.mxu0
      %v632 = vadd.f32 0.0, %v631
      %v633 = vpop.f32.mrf.mxu0
      %v634 = vpop.f32.mrf.mxu0
      %v635 = vadd.f32 0.0, %v634
      %v636 = vpop.f32.mrf.mxu0
      %637 = vmatprep.mubr.bf16.mxu0 0
      %638 = vmatmul.mubr.bf16.gmra.mxu0 %v589
      %v639 = vpop.f32.mrf.mxu0
      %v640 = vadd.f32 0.0, %v639
      %v641 = vpop.f32.mrf.mxu0
      %v642 = vpop.f32.mrf.mxu0
      %v643 = vadd.f32 0.0, %v642
      %v644 = vpop.f32.mrf.mxu0
      %645 = vmatprep.mubr.bf16.mxu0 0
      %646 = vmatmul.mubr.bf16.gmra.mxu0 %v592
      %v647 = vpop.f32.mrf.mxu0
      %v648 = vadd.f32 0.0, %v647
      %v649 = vpop.f32.mrf.mxu0
      %v650 = vpop.f32.mrf.mxu0
      %v651 = vadd.f32 0.0, %v650
      %v652 = vpop.f32.mrf.mxu0
      %653 = vmatprep.mubr.bf16.mxu0 0
      %654 = vmatmul.mubr.bf16.gmra.mxu0 %v595
      %v655 = vpop.f32.mrf.mxu0
      %v656 = vadd.f32 0.0, %v655
      %v657 = vpop.f32.mrf.mxu0
      %v658 = vpop.f32.mrf.mxu0
      %v659 = vadd.f32 0.0, %v658
      %v660 = vpop.f32.mrf.mxu0
      %661 = vdwg.mxu0
      %s662 = scalar_lea.vmem %s293, 64
      %v663 = vld [vmem:[%s662] sm:$0xff]
      %v664 = vld [vmem:[%s662 + $0x8] sm:$0xff]
      %v665 = vld [vmem:[%s662 + $0x10] sm:$0xff]
      %v666 = vld [vmem:[%s662 + $0x18] sm:$0xff]
      %v667 = vld [vmem:[%s662 + $0x20] sm:$0xff]
      %v668 = vld [vmem:[%s662 + $0x28] sm:$0xff]
      %v669 = vld [vmem:[%s662 + $0x30] sm:$0xff]
      %v670 = vld [vmem:[%s662 + $0x38] sm:$0xff]
      %v671 = vpack.c.bf16 %v664, %v663
      %v672 = vpack.c.bf16 %v666, %v665
      %v673 = vpack.c.bf16 %v668, %v667
      %v674 = vpack.c.bf16 %v670, %v669
      %s675 = scalar_lea.vmem %s298, 64
      %v676 = vld [vmem:[%s675] sm:$0xff]
      %v677 = vld [vmem:[%s675 + $0x8] sm:$0xff]
      %v678 = vld [vmem:[%s675 + $0x10] sm:$0xff]
      %v679 = vld [vmem:[%s675 + $0x18] sm:$0xff]
      %v680 = vld [vmem:[%s675 + $0x20] sm:$0xff]
      %v681 = vld [vmem:[%s675 + $0x28] sm:$0xff]
      %v682 = vld [vmem:[%s675 + $0x30] sm:$0xff]
      %v683 = vld [vmem:[%s675 + $0x38] sm:$0xff]
      %v684 = vpack.c.bf16 %v677, %v676
      %v685 = vpack.c.bf16 %v679, %v678
      %v686 = vpack.c.bf16 %v681, %v680
      %v687 = vpack.c.bf16 %v683, %v682
      %s688 = scalar_lea.vmem %s303, 64
      %v689 = vld [vmem:[%s688] sm:$0xff]
      %v690 = vld [vmem:[%s688 + $0x8] sm:$0xff]
      %v691 = vld [vmem:[%s688 + $0x10] sm:$0xff]
      %v692 = vld [vmem:[%s688 + $0x18] sm:$0xff]
      %v693 = vld [vmem:[%s688 + $0x20] sm:$0xff]
      %v694 = vld [vmem:[%s688 + $0x28] sm:$0xff]
      %v695 = vld [vmem:[%s688 + $0x30] sm:$0xff]
      %v696 = vld [vmem:[%s688 + $0x38] sm:$0xff]
      %v697 = vpack.c.bf16 %v690, %v689
      %v698 = vpack.c.bf16 %v692, %v691
      %v699 = vpack.c.bf16 %v694, %v693
      %v700 = vpack.c.bf16 %v696, %v695
      %v702 = vsel %vm359, %v671, 0
      %v705 = vsel %vm359, %v672, 0
      %v708 = vsel %vm359, %v673, 0
      %v711 = vsel %vm359, %v674, 0
      %v714 = vsel %vm359, %v684, 0
      %v717 = vsel %vm359, %v685, 0
      %v720 = vsel %vm359, %v686, 0
      %v723 = vsel %vm359, %v687, 0
      %725 = vmatprep.subr.bf16.mxu0 0
      %726 = vmatpush1.bf16.xpose.msra.mxu0 0
      %727 = vmatprep.subr.bf16.mxu0 0
      %728 = vmatpush1.bf16.xpose.msra.mxu0 0
      %729 = vmatprep.subr.bf16.mxu0 0
      %730 = vmatpush1.bf16.xpose.msra.mxu0 0
      %731 = vmatprep.subr.bf16.mxu0 0
      %732 = vmatpush1.bf16.xpose.msra.mxu0 0
      %733 = vmatprep.subr.bf16.mxu0 0
      %734 = vmatpush1.bf16.xpose.msra.mxu0 %v723
      %735 = vmatprep.subr.bf16.mxu0 0
      %736 = vmatpush1.bf16.xpose.msra.mxu0 %v720
      %737 = vmatprep.subr.bf16.mxu0 0
      %738 = vmatpush1.bf16.xpose.msra.mxu0 %v717
      %739 = vmatprep.subr.bf16.mxu0 0
      %740 = vmatpush1.bf16.xpose.msra.mxu0 %v714
      %741 = vmatprep.subr.bf16.mxu0 0
      %742 = vmatpush2.bf16.xpose.msra.mxu0 0
      %743 = vmatprep.subr.bf16.mxu0 0
      %744 = vmatpush2.bf16.xpose.msra.mxu0 0
      %745 = vmatprep.subr.bf16.mxu0 0
      %746 = vmatpush2.bf16.xpose.msra.mxu0 0
      %747 = vmatprep.subr.bf16.mxu0 0
      %748 = vmatpush2.bf16.xpose.msra.mxu0 0
      %749 = vmatprep.subr.bf16.mxu0 0
      %750 = vmatpush2.bf16.xpose.msra.mxu0 0
      %751 = vmatprep.subr.bf16.mxu0 0
      %752 = vmatpush2.bf16.xpose.msra.mxu0 0
      %753 = vmatprep.subr.bf16.mxu0 0
      %754 = vmatpush2.bf16.xpose.msra.mxu0 0
      %755 = vmatprep.subr.bf16.mxu0 0
      %756 = vmatpush2.bf16.xpose.msra.mxu0 0
      %757 = vmatprep.mubr.bf16.mxu0 0
      %758 = vmatmul.mubr.bf16.gmra.mxu0 %v702
      %v759 = vpop.f32.mrf.mxu0
      %v760 = vadd.f32 0.0, %v759
      %v761 = vpop.f32.mrf.mxu0
      %v762 = vpop.f32.mrf.mxu0
      %v763 = vadd.f32 0.0, %v762
      %v764 = vpop.f32.mrf.mxu0
      %765 = vmatprep.mubr.bf16.mxu0 0
      %766 = vmatmul.mubr.bf16.gmra.mxu0 %v705
      %v767 = vpop.f32.mrf.mxu0
      %v768 = vadd.f32 0.0, %v767
      %v769 = vpop.f32.mrf.mxu0
      %v770 = vpop.f32.mrf.mxu0
      %v771 = vadd.f32 0.0, %v770
      %v772 = vpop.f32.mrf.mxu0
      %773 = vmatprep.mubr.bf16.mxu0 0
      %774 = vmatmul.mubr.bf16.gmra.mxu0 %v708
      %v775 = vpop.f32.mrf.mxu0
      %v776 = vadd.f32 0.0, %v775
      %v777 = vpop.f32.mrf.mxu0
      %v778 = vpop.f32.mrf.mxu0
      %v779 = vadd.f32 0.0, %v778
      %v780 = vpop.f32.mrf.mxu0
      %781 = vmatprep.mubr.bf16.mxu0 0
      %782 = vmatmul.mubr.bf16.gmra.mxu0 %v711
      %v783 = vpop.f32.mrf.mxu0
      %v784 = vadd.f32 0.0, %v783
      %v785 = vpop.f32.mrf.mxu0
      %v786 = vpop.f32.mrf.mxu0
      %v787 = vadd.f32 0.0, %v786
      %v788 = vpop.f32.mrf.mxu0
      %789 = vdwg.mxu0
      %v790 = vmul.f32 %v760, %v449
      %v791 = vmul.f32 %v763, %v449
      %v792 = vmul.f32 %v768, %v449
      %v793 = vmul.f32 %v771, %v449
      %v794 = vmul.f32 %v776, %v449
      %v795 = vmul.f32 %v779, %v449
      %v796 = vmul.f32 %v784, %v449
      %v797 = vmul.f32 %v787, %v449
      %v798 = vsel %vm458, %v790, -inf
      %799 = vmax.xlane.f32.xlu0 %v798
      %v800 = vpop.xlane.xlu0 %799
      %v801 = vsel %vm458, %v791, -inf
      %802 = vmax.xlane.f32.xlu0 %v801
      %v803 = vpop.xlane.xlu0 %802
      %v804 = vsel %vm458, %v792, -inf
      %805 = vmax.xlane.f32.xlu0 %v804
      %v806 = vpop.xlane.xlu0 %805
      %v807 = vsel %vm458, %v793, -inf
      %808 = vmax.xlane.f32.xlu0 %v807
      %v809 = vpop.xlane.xlu0 %808
      %v810 = vsel %vm458, %v794, -inf
      %811 = vmax.xlane.f32.xlu0 %v810
      %v812 = vpop.xlane.xlu0 %811
      %v813 = vsel %vm458, %v795, -inf
      %814 = vmax.xlane.f32.xlu0 %v813
      %v815 = vpop.xlane.xlu0 %814
      %v816 = vsel %vm458, %v796, -inf
      %817 = vmax.xlane.f32.xlu0 %v816
      %v818 = vpop.xlane.xlu0 %817
      %v819 = vsel %vm458, %v797, -inf
      %820 = vmax.xlane.f32.xlu0 %v819
      %v821 = vpop.xlane.xlu0 %820
      %v822 = vsub.f32 %v790, %v800
      %v823 = vsub.f32 %v791, %v803
      %v824 = vsub.f32 %v792, %v806
      %v825 = vsub.f32 %v793, %v809
      %v826 = vsub.f32 %v794, %v812
      %v827 = vsub.f32 %v795, %v815
      %v828 = vsub.f32 %v796, %v818
      %v829 = vsub.f32 %v797, %v821
      %v830 = vmul.f32 %v822, 1.442695
      %v831 = vpow.pop %v830
      %v832 = vmul.f32 %v823, 1.442695
      %v833 = vpow.pop %v832
      %v834 = vmul.f32 %v824, 1.442695
      %v835 = vpow.pop %v834
      %v836 = vmul.f32 %v825, 1.442695
      %v837 = vpow.pop %v836
      %v838 = vmul.f32 %v826, 1.442695
      %v839 = vpow.pop %v838
      %v840 = vmul.f32 %v827, 1.442695
      %v841 = vpow.pop %v840
      %v842 = vmul.f32 %v828, 1.442695
      %v843 = vpow.pop %v842
      %v844 = vmul.f32 %v829, 1.442695
      %v845 = vpow.pop %v844
      %v846 = vsel %vm458, %v831, 0.0
      %847 = vadd.xlane.f32.xlu0 %v846
      %v848 = vpop.xlane.xlu0 %847
      %v849 = vsel %vm458, %v833, 0.0
      %850 = vadd.xlane.f32.xlu0 %v849
      %v851 = vpop.xlane.xlu0 %850
      %v852 = vsel %vm458, %v835, 0.0
      %853 = vadd.xlane.f32.xlu0 %v852
      %v854 = vpop.xlane.xlu0 %853
      %v855 = vsel %vm458, %v837, 0.0
      %856 = vadd.xlane.f32.xlu0 %v855
      %v857 = vpop.xlane.xlu0 %856
      %v858 = vsel %vm458, %v839, 0.0
      %859 = vadd.xlane.f32.xlu0 %v858
      %v860 = vpop.xlane.xlu0 %859
      %v861 = vsel %vm458, %v841, 0.0
      %862 = vadd.xlane.f32.xlu0 %v861
      %v863 = vpop.xlane.xlu0 %862
      %v864 = vsel %vm458, %v843, 0.0
      %865 = vadd.xlane.f32.xlu0 %v864
      %v866 = vpop.xlane.xlu0 %865
      %v867 = vsel %vm458, %v845, 0.0
      %868 = vadd.xlane.f32.xlu0 %v867
      %v869 = vpop.xlane.xlu0 %868
      %v870 = vrcp.pop %v848
      %v871 = vrcp.pop %v851
      %v872 = vrcp.pop %v854
      %v873 = vrcp.pop %v857
      %v874 = vrcp.pop %v860
      %v875 = vrcp.pop %v863
      %v876 = vrcp.pop %v866
      %v877 = vrcp.pop %v869
      %v878 = vmul.f32 %v831, %v870
      %v879 = vmul.f32 %v833, %v871
      %v880 = vmul.f32 %v835, %v872
      %v881 = vmul.f32 %v837, %v873
      %v882 = vmul.f32 %v839, %v874
      %v883 = vmul.f32 %v841, %v875
      %v884 = vmul.f32 %v843, %v876
      %v885 = vmul.f32 %v845, %v877
      %s886 = scalar_lea.vmem %s308, 64
      %v887 = vld [vmem:[%s886] sm:$0xff]
      %v888 = vld [vmem:[%s886 + $0x8] sm:$0xff]
      %v889 = vld [vmem:[%s886 + $0x10] sm:$0xff]
      %v890 = vld [vmem:[%s886 + $0x18] sm:$0xff]
      %v891 = vld [vmem:[%s886 + $0x20] sm:$0xff]
      %v892 = vld [vmem:[%s886 + $0x28] sm:$0xff]
      %v893 = vld [vmem:[%s886 + $0x30] sm:$0xff]
      %v894 = vld [vmem:[%s886 + $0x38] sm:$0xff]
      %vm895 = vcmp.ge.f32.partialorder %v887, %v555
      %vm896 = vcmp.ge.f32.partialorder %v888, %v555
      %vm897 = vcmp.ge.f32.partialorder %v889, %v555
      %vm898 = vcmp.ge.f32.partialorder %v890, %v555
      %vm899 = vcmp.ge.f32.partialorder %v891, %v555
      %vm900 = vcmp.ge.f32.partialorder %v892, %v555
      %vm901 = vcmp.ge.f32.partialorder %v893, %v555
      %vm902 = vcmp.ge.f32.partialorder %v894, %v555
      %v903 = vmul.f32 %v878, %v564
      %v904 = vmul.f32 %v879, %v564
      %v905 = vmul.f32 %v880, %v564
      %v906 = vmul.f32 %v881, %v564
      %v907 = vmul.f32 %v882, %v564
      %v908 = vmul.f32 %v883, %v564
      %v909 = vmul.f32 %v884, %v564
      %v910 = vmul.f32 %v885, %v564
      %v911 = vsel %vm895, %v903, 0.0
      %v912 = vsel %vm896, %v904, 0.0
      %v913 = vsel %vm897, %v905, 0.0
      %v914 = vsel %vm898, %v906, 0.0
      %v915 = vsel %vm899, %v907, 0.0
      %v916 = vsel %vm900, %v908, 0.0
      %v917 = vsel %vm901, %v909, 0.0
      %v918 = vsel %vm902, %v910, 0.0
      %v919 = vpack.c.bf16 %v912, %v911
      %v920 = vpack.c.bf16 %v914, %v913
      %v921 = vpack.c.bf16 %v916, %v915
      %v922 = vpack.c.bf16 %v918, %v917
      %v924 = vsel %vm458, %v919, 0
      %v927 = vsel %vm458, %v920, 0
      %v930 = vsel %vm458, %v921, 0
      %v933 = vsel %vm458, %v922, 0
      %935 = vmatprep.subr.bf16.mxu0 0
      %936 = vmatpush1.bf16.msra.mxu0 0
      %937 = vmatprep.subr.bf16.mxu0 0
      %938 = vmatpush1.bf16.msra.mxu0 0
      %939 = vmatprep.subr.bf16.mxu0 0
      %940 = vmatpush1.bf16.msra.mxu0 0
      %941 = vmatprep.subr.bf16.mxu0 0
      %942 = vmatpush1.bf16.msra.mxu0 0
      %943 = vmatprep.subr.bf16.mxu0 0
      %944 = vmatpush1.bf16.msra.mxu0 %v700
      %945 = vmatprep.subr.bf16.mxu0 0
      %946 = vmatpush1.bf16.msra.mxu0 %v699
      %947 = vmatprep.subr.bf16.mxu0 0
      %948 = vmatpush1.bf16.msra.mxu0 %v698
      %949 = vmatprep.subr.bf16.mxu0 0
      %950 = vmatpush1.bf16.msra.mxu0 %v697
      %951 = vmatprep.subr.bf16.mxu0 0
      %952 = vmatpush2.bf16.msra.mxu0 0
      %953 = vmatprep.subr.bf16.mxu0 0
      %954 = vmatpush2.bf16.msra.mxu0 0
      %955 = vmatprep.subr.bf16.mxu0 0
      %956 = vmatpush2.bf16.msra.mxu0 0
      %957 = vmatprep.subr.bf16.mxu0 0
      %958 = vmatpush2.bf16.msra.mxu0 0
      %959 = vmatprep.subr.bf16.mxu0 0
      %960 = vmatpush2.bf16.msra.mxu0 0
      %961 = vmatprep.subr.bf16.mxu0 0
      %962 = vmatpush2.bf16.msra.mxu0 0
      %963 = vmatprep.subr.bf16.mxu0 0
      %964 = vmatpush2.bf16.msra.mxu0 0
      %965 = vmatprep.subr.bf16.mxu0 0
      %966 = vmatpush2.bf16.msra.mxu0 0
      %967 = vmatprep.mubr.bf16.mxu0 0
      %968 = vmatmul.mubr.bf16.gmra.mxu0 %v924
      %v969 = vpop.f32.mrf.mxu0
      %v970 = vadd.f32 0.0, %v969
      %v971 = vpop.f32.mrf.mxu0
      %v972 = vpop.f32.mrf.mxu0
      %v973 = vadd.f32 0.0, %v972
      %v974 = vpop.f32.mrf.mxu0
      %975 = vmatprep.mubr.bf16.mxu0 0
      %976 = vmatmul.mubr.bf16.gmra.mxu0 %v927
      %v977 = vpop.f32.mrf.mxu0
      %v978 = vadd.f32 0.0, %v977
      %v979 = vpop.f32.mrf.mxu0
      %v980 = vpop.f32.mrf.mxu0
      %v981 = vadd.f32 0.0, %v980
      %v982 = vpop.f32.mrf.mxu0
      %983 = vmatprep.mubr.bf16.mxu0 0
      %984 = vmatmul.mubr.bf16.gmra.mxu0 %v930
      %v985 = vpop.f32.mrf.mxu0
      %v986 = vadd.f32 0.0, %v985
      %v987 = vpop.f32.mrf.mxu0
      %v988 = vpop.f32.mrf.mxu0
      %v989 = vadd.f32 0.0, %v988
      %v990 = vpop.f32.mrf.mxu0
      %991 = vmatprep.mubr.bf16.mxu0 0
      %992 = vmatmul.mubr.bf16.gmra.mxu0 %v933
      %v993 = vpop.f32.mrf.mxu0
      %v994 = vadd.f32 0.0, %v993
      %v995 = vpop.f32.mrf.mxu0
      %v996 = vpop.f32.mrf.mxu0
      %v997 = vadd.f32 0.0, %v996
      %v998 = vpop.f32.mrf.mxu0
      %999 = vdwg.mxu0
      %s1000 = scalar_lea.vmem %s293, 128
      %v1001 = vld [vmem:[%s1000] sm:$0xff]
      %v1002 = vld [vmem:[%s1000 + $0x8] sm:$0xff]
      %v1003 = vld [vmem:[%s1000 + $0x10] sm:$0xff]
      %v1004 = vld [vmem:[%s1000 + $0x18] sm:$0xff]
      %v1005 = vld [vmem:[%s1000 + $0x20] sm:$0xff]
      %v1006 = vld [vmem:[%s1000 + $0x28] sm:$0xff]
      %v1007 = vld [vmem:[%s1000 + $0x30] sm:$0xff]
      %v1008 = vld [vmem:[%s1000 + $0x38] sm:$0xff]
      %v1009 = vpack.c.bf16 %v1002, %v1001
      %v1010 = vpack.c.bf16 %v1004, %v1003
      %v1011 = vpack.c.bf16 %v1006, %v1005
      %v1012 = vpack.c.bf16 %v1008, %v1007
      %s1013 = scalar_lea.vmem %s298, 128
      %v1014 = vld [vmem:[%s1013] sm:$0xff]
      %v1015 = vld [vmem:[%s1013 + $0x8] sm:$0xff]
      %v1016 = vld [vmem:[%s1013 + $0x10] sm:$0xff]
      %v1017 = vld [vmem:[%s1013 + $0x18] sm:$0xff]
      %v1018 = vld [vmem:[%s1013 + $0x20] sm:$0xff]
      %v1019 = vld [vmem:[%s1013 + $0x28] sm:$0xff]
      %v1020 = vld [vmem:[%s1013 + $0x30] sm:$0xff]
      %v1021 = vld [vmem:[%s1013 + $0x38] sm:$0xff]
      %v1022 = vpack.c.bf16 %v1015, %v1014
      %v1023 = vpack.c.bf16 %v1017, %v1016
      %v1024 = vpack.c.bf16 %v1019, %v1018
      %v1025 = vpack.c.bf16 %v1021, %v1020
      %s1026 = scalar_lea.vmem %s303, 128
      %v1027 = vld [vmem:[%s1026] sm:$0xff]
      %v1028 = vld [vmem:[%s1026 + $0x8] sm:$0xff]
      %v1029 = vld [vmem:[%s1026 + $0x10] sm:$0xff]
      %v1030 = vld [vmem:[%s1026 + $0x18] sm:$0xff]
      %v1031 = vld [vmem:[%s1026 + $0x20] sm:$0xff]
      %v1032 = vld [vmem:[%s1026 + $0x28] sm:$0xff]
      %v1033 = vld [vmem:[%s1026 + $0x30] sm:$0xff]
      %v1034 = vld [vmem:[%s1026 + $0x38] sm:$0xff]
      %v1035 = vpack.c.bf16 %v1028, %v1027
      %v1036 = vpack.c.bf16 %v1030, %v1029
      %v1037 = vpack.c.bf16 %v1032, %v1031
      %v1038 = vpack.c.bf16 %v1034, %v1033
      %v1040 = vsel %vm359, %v1009, 0
      %v1043 = vsel %vm359, %v1010, 0
      %v1046 = vsel %vm359, %v1011, 0
      %v1049 = vsel %vm359, %v1012, 0
      %v1052 = vsel %vm359, %v1022, 0
      %v1055 = vsel %vm359, %v1023, 0
      %v1058 = vsel %vm359, %v1024, 0
      %v1061 = vsel %vm359, %v1025, 0
      %1063 = vmatprep.subr.bf16.mxu0 0
      %1064 = vmatpush1.bf16.xpose.msra.mxu0 0
      %1065 = vmatprep.subr.bf16.mxu0 0
      %1066 = vmatpush1.bf16.xpose.msra.mxu0 0
      %1067 = vmatprep.subr.bf16.mxu0 0
      %1068 = vmatpush1.bf16.xpose.msra.mxu0 0
      %1069 = vmatprep.subr.bf16.mxu0 0
      %1070 = vmatpush1.bf16.xpose.msra.mxu0 0
      %1071 = vmatprep.subr.bf16.mxu0 0
      %1072 = vmatpush1.bf16.xpose.msra.mxu0 %v1061
      %1073 = vmatprep.subr.bf16.mxu0 0
      %1074 = vmatpush1.bf16.xpose.msra.mxu0 %v1058
      %1075 = vmatprep.subr.bf16.mxu0 0
      %1076 = vmatpush1.bf16.xpose.msra.mxu0 %v1055
      %1077 = vmatprep.subr.bf16.mxu0 0
      %1078 = vmatpush1.bf16.xpose.msra.mxu0 %v1052
      %1079 = vmatprep.subr.bf16.mxu0 0
      %1080 = vmatpush2.bf16.xpose.msra.mxu0 0
      %1081 = vmatprep.subr.bf16.mxu0 0
      %1082 = vmatpush2.bf16.xpose.msra.mxu0 0
      %1083 = vmatprep.subr.bf16.mxu0 0
      %1084 = vmatpush2.bf16.xpose.msra.mxu0 0
      %1085 = vmatprep.subr.bf16.mxu0 0
      %1086 = vmatpush2.bf16.xpose.msra.mxu0 0
      %1087 = vmatprep.subr.bf16.mxu0 0
      %1088 = vmatpush2.bf16.xpose.msra.mxu0 0
      %1089 = vmatprep.subr.bf16.mxu0 0
      %1090 = vmatpush2.bf16.xpose.msra.mxu0 0
      %1091 = vmatprep.subr.bf16.mxu0 0
      %1092 = vmatpush2.bf16.xpose.msra.mxu0 0
      %1093 = vmatprep.subr.bf16.mxu0 0
      %1094 = vmatpush2.bf16.xpose.msra.mxu0 0
      %1095 = vmatprep.mubr.bf16.mxu0 0
      %1096 = vmatmul.mubr.bf16.gmra.mxu0 %v1040
      %v1097 = vpop.f32.mrf.mxu0
      %v1098 = vadd.f32 0.0, %v1097
      %v1099 = vpop.f32.mrf.mxu0
      %v1100 = vpop.f32.mrf.mxu0
      %v1101 = vadd.f32 0.0, %v1100
      %v1102 = vpop.f32.mrf.mxu0
      %1103 = vmatprep.mubr.bf16.mxu0 0
      %1104 = vmatmul.mubr.bf16.gmra.mxu0 %v1043
      %v1105 = vpop.f32.mrf.mxu0
      %v1106 = vadd.f32 0.0, %v1105
      %v1107 = vpop.f32.mrf.mxu0
      %v1108 = vpop.f32.mrf.mxu0
      %v1109 = vadd.f32 0.0, %v1108
      %v1110 = vpop.f32.mrf.mxu0
      %1111 = vmatprep.mubr.bf16.mxu0 0
      %1112 = vmatmul.mubr.bf16.gmra.mxu0 %v1046
      %v1113 = vpop.f32.mrf.mxu0
      %v1114 = vadd.f32 0.0, %v1113
      %v1115 = vpop.f32.mrf.mxu0
      %v1116 = vpop.f32.mrf.mxu0
      %v1117 = vadd.f32 0.0, %v1116
      %v1118 = vpop.f32.mrf.mxu0
      %1119 = vmatprep.mubr.bf16.mxu0 0
      %1120 = vmatmul.mubr.bf16.gmra.mxu0 %v1049
      %v1121 = vpop.f32.mrf.mxu0
      %v1122 = vadd.f32 0.0, %v1121
      %v1123 = vpop.f32.mrf.mxu0
      %v1124 = vpop.f32.mrf.mxu0
      %v1125 = vadd.f32 0.0, %v1124
      %v1126 = vpop.f32.mrf.mxu0
      %1127 = vdwg.mxu0
      %v1128 = vmul.f32 %v1098, %v449
      %v1129 = vmul.f32 %v1101, %v449
      %v1130 = vmul.f32 %v1106, %v449
      %v1131 = vmul.f32 %v1109, %v449
      %v1132 = vmul.f32 %v1114, %v449
      %v1133 = vmul.f32 %v1117, %v449
      %v1134 = vmul.f32 %v1122, %v449
      %v1135 = vmul.f32 %v1125, %v449
      %v1136 = vsel %vm458, %v1128, -inf
      %1137 = vmax.xlane.f32.xlu0 %v1136
      %v1138 = vpop.xlane.xlu0 %1137
      %v1139 = vsel %vm458, %v1129, -inf
      %1140 = vmax.xlane.f32.xlu0 %v1139
      %v1141 = vpop.xlane.xlu0 %1140
      %v1142 = vsel %vm458, %v1130, -inf
      %1143 = vmax.xlane.f32.xlu0 %v1142
      %v1144 = vpop.xlane.xlu0 %1143
      %v1145 = vsel %vm458, %v1131, -inf
      %1146 = vmax.xlane.f32.xlu0 %v1145
      %v1147 = vpop.xlane.xlu0 %1146
      %v1148 = vsel %vm458, %v1132, -inf
      %1149 = vmax.xlane.f32.xlu0 %v1148
      %v1150 = vpop.xlane.xlu0 %1149
      %v1151 = vsel %vm458, %v1133, -inf
      %1152 = vmax.xlane.f32.xlu0 %v1151
      %v1153 = vpop.xlane.xlu0 %1152
      %v1154 = vsel %vm458, %v1134, -inf
      %1155 = vmax.xlane.f32.xlu0 %v1154
      %v1156 = vpop.xlane.xlu0 %1155
      %v1157 = vsel %vm458, %v1135, -inf
      %1158 = vmax.xlane.f32.xlu0 %v1157
      %v1159 = vpop.xlane.xlu0 %1158
      %v1160 = vsub.f32 %v1128, %v1138
      %v1161 = vsub.f32 %v1129, %v1141
      %v1162 = vsub.f32 %v1130, %v1144
      %v1163 = vsub.f32 %v1131, %v1147
      %v1164 = vsub.f32 %v1132, %v1150
      %v1165 = vsub.f32 %v1133, %v1153
      %v1166 = vsub.f32 %v1134, %v1156
      %v1167 = vsub.f32 %v1135, %v1159
      %v1168 = vmul.f32 %v1160, 1.442695
      %v1169 = vpow.pop %v1168
      %v1170 = vmul.f32 %v1161, 1.442695
      %v1171 = vpow.pop %v1170
      %v1172 = vmul.f32 %v1162, 1.442695
      %v1173 = vpow.pop %v1172
      %v1174 = vmul.f32 %v1163, 1.442695
      %v1175 = vpow.pop %v1174
      %v1176 = vmul.f32 %v1164, 1.442695
      %v1177 = vpow.pop %v1176
      %v1178 = vmul.f32 %v1165, 1.442695
      %v1179 = vpow.pop %v1178
      %v1180 = vmul.f32 %v1166, 1.442695
      %v1181 = vpow.pop %v1180
      %v1182 = vmul.f32 %v1167, 1.442695
      %v1183 = vpow.pop %v1182
      %v1184 = vsel %vm458, %v1169, 0.0
      %1185 = vadd.xlane.f32.xlu0 %v1184
      %v1186 = vpop.xlane.xlu0 %1185
      %v1187 = vsel %vm458, %v1171, 0.0
      %1188 = vadd.xlane.f32.xlu0 %v1187
      %v1189 = vpop.xlane.xlu0 %1188
      %v1190 = vsel %vm458, %v1173, 0.0
      %1191 = vadd.xlane.f32.xlu0 %v1190
      %v1192 = vpop.xlane.xlu0 %1191
      %v1193 = vsel %vm458, %v1175, 0.0
      %1194 = vadd.xlane.f32.xlu0 %v1193
      %v1195 = vpop.xlane.xlu0 %1194
      %v1196 = vsel %vm458, %v1177, 0.0
      %1197 = vadd.xlane.f32.xlu0 %v1196
      %v1198 = vpop.xlane.xlu0 %1197
      %v1199 = vsel %vm458, %v1179, 0.0
      %1200 = vadd.xlane.f32.xlu0 %v1199
      %v1201 = vpop.xlane.xlu0 %1200
      %v1202 = vsel %vm458, %v1181, 0.0
      %1203 = vadd.xlane.f32.xlu0 %v1202
      %v1204 = vpop.xlane.xlu0 %1203
      %v1205 = vsel %vm458, %v1183, 0.0
      %1206 = vadd.xlane.f32.xlu0 %v1205
      %v1207 = vpop.xlane.xlu0 %1206
      %v1208 = vrcp.pop %v1186
      %v1209 = vrcp.pop %v1189
      %v1210 = vrcp.pop %v1192
      %v1211 = vrcp.pop %v1195
      %v1212 = vrcp.pop %v1198
      %v1213 = vrcp.pop %v1201
      %v1214 = vrcp.pop %v1204
      %v1215 = vrcp.pop %v1207
      %v1216 = vmul.f32 %v1169, %v1208
      %v1217 = vmul.f32 %v1171, %v1209
      %v1218 = vmul.f32 %v1173, %v1210
      %v1219 = vmul.f32 %v1175, %v1211
      %v1220 = vmul.f32 %v1177, %v1212
      %v1221 = vmul.f32 %v1179, %v1213
      %v1222 = vmul.f32 %v1181, %v1214
      %v1223 = vmul.f32 %v1183, %v1215
      %s1224 = scalar_lea.vmem %s308, 128
      %v1225 = vld [vmem:[%s1224] sm:$0xff]
      %v1226 = vld [vmem:[%s1224 + $0x8] sm:$0xff]
      %v1227 = vld [vmem:[%s1224 + $0x10] sm:$0xff]
      %v1228 = vld [vmem:[%s1224 + $0x18] sm:$0xff]
      %v1229 = vld [vmem:[%s1224 + $0x20] sm:$0xff]
      %v1230 = vld [vmem:[%s1224 + $0x28] sm:$0xff]
      %v1231 = vld [vmem:[%s1224 + $0x30] sm:$0xff]
      %v1232 = vld [vmem:[%s1224 + $0x38] sm:$0xff]
      %vm1233 = vcmp.ge.f32.partialorder %v1225, %v555
      %vm1234 = vcmp.ge.f32.partialorder %v1226, %v555
      %vm1235 = vcmp.ge.f32.partialorder %v1227, %v555
      %vm1236 = vcmp.ge.f32.partialorder %v1228, %v555
      %vm1237 = vcmp.ge.f32.partialorder %v1229, %v555
      %vm1238 = vcmp.ge.f32.partialorder %v1230, %v555
      %vm1239 = vcmp.ge.f32.partialorder %v1231, %v555
      %vm1240 = vcmp.ge.f32.partialorder %v1232, %v555
      %v1241 = vmul.f32 %v1216, %v564
      %v1242 = vmul.f32 %v1217, %v564
      %v1243 = vmul.f32 %v1218, %v564
      %v1244 = vmul.f32 %v1219, %v564
      %v1245 = vmul.f32 %v1220, %v564
      %v1246 = vmul.f32 %v1221, %v564
      %v1247 = vmul.f32 %v1222, %v564
      %v1248 = vmul.f32 %v1223, %v564
      %v1249 = vsel %vm1233, %v1241, 0.0
      %v1250 = vsel %vm1234, %v1242, 0.0
      %v1251 = vsel %vm1235, %v1243, 0.0
      %v1252 = vsel %vm1236, %v1244, 0.0
      %v1253 = vsel %vm1237, %v1245, 0.0
      %v1254 = vsel %vm1238, %v1246, 0.0
      %v1255 = vsel %vm1239, %v1247, 0.0
      %v1256 = vsel %vm1240, %v1248, 0.0
      %v1257 = vpack.c.bf16 %v1250, %v1249
      %v1258 = vpack.c.bf16 %v1252, %v1251
      %v1259 = vpack.c.bf16 %v1254, %v1253
      %v1260 = vpack.c.bf16 %v1256, %v1255
      %v1262 = vsel %vm458, %v1257, 0
      %v1265 = vsel %vm458, %v1258, 0
      %v1268 = vsel %vm458, %v1259, 0
      %v1271 = vsel %vm458, %v1260, 0
      %1273 = vmatprep.subr.bf16.mxu0 0
      %1274 = vmatpush1.bf16.msra.mxu0 0
      %1275 = vmatprep.subr.bf16.mxu0 0
      %1276 = vmatpush1.bf16.msra.mxu0 0
      %1277 = vmatprep.subr.bf16.mxu0 0
      %1278 = vmatpush1.bf16.msra.mxu0 0
      %1279 = vmatprep.subr.bf16.mxu0 0
      %1280 = vmatpush1.bf16.msra.mxu0 0
      %1281 = vmatprep.subr.bf16.mxu0 0
      %1282 = vmatpush1.bf16.msra.mxu0 %v1038
      %1283 = vmatprep.subr.bf16.mxu0 0
      %1284 = vmatpush1.bf16.msra.mxu0 %v1037
      %1285 = vmatprep.subr.bf16.mxu0 0
      %1286 = vmatpush1.bf16.msra.mxu0 %v1036
      %1287 = vmatprep.subr.bf16.mxu0 0
      %1288 = vmatpush1.bf16.msra.mxu0 %v1035
      %1289 = vmatprep.subr.bf16.mxu0 0
      %1290 = vmatpush2.bf16.msra.mxu0 0
      %1291 = vmatprep.subr.bf16.mxu0 0
      %1292 = vmatpush2.bf16.msra.mxu0 0
      %1293 = vmatprep.subr.bf16.mxu0 0
      %1294 = vmatpush2.bf16.msra.mxu0 0
      %1295 = vmatprep.subr.bf16.mxu0 0
      %1296 = vmatpush2.bf16.msra.mxu0 0
      %1297 = vmatprep.subr.bf16.mxu0 0
      %1298 = vmatpush2.bf16.msra.mxu0 0
      %1299 = vmatprep.subr.bf16.mxu0 0
      %1300 = vmatpush2.bf16.msra.mxu0 0
      %1301 = vmatprep.subr.bf16.mxu0 0
      %1302 = vmatpush2.bf16.msra.mxu0 0
      %1303 = vmatprep.subr.bf16.mxu0 0
      %1304 = vmatpush2.bf16.msra.mxu0 0
      %1305 = vmatprep.mubr.bf16.mxu0 0
      %1306 = vmatmul.mubr.bf16.gmra.mxu0 %v1262
      %v1307 = vpop.f32.mrf.mxu0
      %v1308 = vadd.f32 0.0, %v1307
      %v1309 = vpop.f32.mrf.mxu0
      %v1310 = vpop.f32.mrf.mxu0
      %v1311 = vadd.f32 0.0, %v1310
      %v1312 = vpop.f32.mrf.mxu0
      %1313 = vmatprep.mubr.bf16.mxu0 0
      %1314 = vmatmul.mubr.bf16.gmra.mxu0 %v1265
      %v1315 = vpop.f32.mrf.mxu0
      %v1316 = vadd.f32 0.0, %v1315
      %v1317 = vpop.f32.mrf.mxu0
      %v1318 = vpop.f32.mrf.mxu0
      %v1319 = vadd.f32 0.0, %v1318
      %v1320 = vpop.f32.mrf.mxu0
      %1321 = vmatprep.mubr.bf16.mxu0 0
      %1322 = vmatmul.mubr.bf16.gmra.mxu0 %v1268
      %v1323 = vpop.f32.mrf.mxu0
      %v1324 = vadd.f32 0.0, %v1323
      %v1325 = vpop.f32.mrf.mxu0
      %v1326 = vpop.f32.mrf.mxu0
      %v1327 = vadd.f32 0.0, %v1326
      %v1328 = vpop.f32.mrf.mxu0
      %1329 = vmatprep.mubr.bf16.mxu0 0
      %1330 = vmatmul.mubr.bf16.gmra.mxu0 %v1271
      %v1331 = vpop.f32.mrf.mxu0
      %v1332 = vadd.f32 0.0, %v1331
      %v1333 = vpop.f32.mrf.mxu0
      %v1334 = vpop.f32.mrf.mxu0
      %v1335 = vadd.f32 0.0, %v1334
      %v1336 = vpop.f32.mrf.mxu0
      %1337 = vdwg.mxu0
      %s1338 = scalar_lea.vmem %s293, 192
      %v1339 = vld [vmem:[%s1338] sm:$0xff]
      %v1340 = vld [vmem:[%s1338 + $0x8] sm:$0xff]
      %v1341 = vld [vmem:[%s1338 + $0x10] sm:$0xff]
      %v1342 = vld [vmem:[%s1338 + $0x18] sm:$0xff]
      %v1343 = vld [vmem:[%s1338 + $0x20] sm:$0xff]
      %v1344 = vld [vmem:[%s1338 + $0x28] sm:$0xff]
      %v1345 = vld [vmem:[%s1338 + $0x30] sm:$0xff]
      %v1346 = vld [vmem:[%s1338 + $0x38] sm:$0xff]
      %v1347 = vpack.c.bf16 %v1340, %v1339
      %v1348 = vpack.c.bf16 %v1342, %v1341
      %v1349 = vpack.c.bf16 %v1344, %v1343
      %v1350 = vpack.c.bf16 %v1346, %v1345
      %s1351 = scalar_lea.vmem %s298, 192
      %v1352 = vld [vmem:[%s1351] sm:$0xff]
      %v1353 = vld [vmem:[%s1351 + $0x8] sm:$0xff]
      %v1354 = vld [vmem:[%s1351 + $0x10] sm:$0xff]
      %v1355 = vld [vmem:[%s1351 + $0x18] sm:$0xff]
      %v1356 = vld [vmem:[%s1351 + $0x20] sm:$0xff]
      %v1357 = vld [vmem:[%s1351 + $0x28] sm:$0xff]
      %v1358 = vld [vmem:[%s1351 + $0x30] sm:$0xff]
      %v1359 = vld [vmem:[%s1351 + $0x38] sm:$0xff]
      %v1360 = vpack.c.bf16 %v1353, %v1352
      %v1361 = vpack.c.bf16 %v1355, %v1354
      %v1362 = vpack.c.bf16 %v1357, %v1356
      %v1363 = vpack.c.bf16 %v1359, %v1358
      %s1364 = scalar_lea.vmem %s303, 192
      %v1365 = vld [vmem:[%s1364] sm:$0xff]
      %v1366 = vld [vmem:[%s1364 + $0x8] sm:$0xff]
      %v1367 = vld [vmem:[%s1364 + $0x10] sm:$0xff]
      %v1368 = vld [vmem:[%s1364 + $0x18] sm:$0xff]
      %v1369 = vld [vmem:[%s1364 + $0x20] sm:$0xff]
      %v1370 = vld [vmem:[%s1364 + $0x28] sm:$0xff]
      %v1371 = vld [vmem:[%s1364 + $0x30] sm:$0xff]
      %v1372 = vld [vmem:[%s1364 + $0x38] sm:$0xff]
      %v1373 = vpack.c.bf16 %v1366, %v1365
      %v1374 = vpack.c.bf16 %v1368, %v1367
      %v1375 = vpack.c.bf16 %v1370, %v1369
      %v1376 = vpack.c.bf16 %v1372, %v1371
      %v1378 = vsel %vm359, %v1347, 0
      %v1381 = vsel %vm359, %v1348, 0
      %v1384 = vsel %vm359, %v1349, 0
      %v1387 = vsel %vm359, %v1350, 0
      %v1390 = vsel %vm359, %v1360, 0
      %v1393 = vsel %vm359, %v1361, 0
      %v1396 = vsel %vm359, %v1362, 0
      %v1399 = vsel %vm359, %v1363, 0
      %1401 = vmatprep.subr.bf16.mxu0 0
      %1402 = vmatpush1.bf16.xpose.msra.mxu0 0
      %1403 = vmatprep.subr.bf16.mxu0 0
      %1404 = vmatpush1.bf16.xpose.msra.mxu0 0
      %1405 = vmatprep.subr.bf16.mxu0 0
      %1406 = vmatpush1.bf16.xpose.msra.mxu0 0
      %1407 = vmatprep.subr.bf16.mxu0 0
      %1408 = vmatpush1.bf16.xpose.msra.mxu0 0
      %1409 = vmatprep.subr.bf16.mxu0 0
      %1410 = vmatpush1.bf16.xpose.msra.mxu0 %v1399
      %1411 = vmatprep.subr.bf16.mxu0 0
      %1412 = vmatpush1.bf16.xpose.msra.mxu0 %v1396
      %1413 = vmatprep.subr.bf16.mxu0 0
      %1414 = vmatpush1.bf16.xpose.msra.mxu0 %v1393
      %1415 = vmatprep.subr.bf16.mxu0 0
      %1416 = vmatpush1.bf16.xpose.msra.mxu0 %v1390
      %1417 = vmatprep.subr.bf16.mxu0 0
      %1418 = vmatpush2.bf16.xpose.msra.mxu0 0
      %1419 = vmatprep.subr.bf16.mxu0 0
      %1420 = vmatpush2.bf16.xpose.msra.mxu0 0
      %1421 = vmatprep.subr.bf16.mxu0 0
      %1422 = vmatpush2.bf16.xpose.msra.mxu0 0
      %1423 = vmatprep.subr.bf16.mxu0 0
      %1424 = vmatpush2.bf16.xpose.msra.mxu0 0
      %1425 = vmatprep.subr.bf16.mxu0 0
      %1426 = vmatpush2.bf16.xpose.msra.mxu0 0
      %1427 = vmatprep.subr.bf16.mxu0 0
      %1428 = vmatpush2.bf16.xpose.msra.mxu0 0
      %1429 = vmatprep.subr.bf16.mxu0 0
      %1430 = vmatpush2.bf16.xpose.msra.mxu0 0
      %1431 = vmatprep.subr.bf16.mxu0 0
      %1432 = vmatpush2.bf16.xpose.msra.mxu0 0
      %1433 = vmatprep.mubr.bf16.mxu0 0
      %1434 = vmatmul.mubr.bf16.gmra.mxu0 %v1378
      %v1435 = vpop.f32.mrf.mxu0
      %v1436 = vadd.f32 0.0, %v1435
      %v1437 = vpop.f32.mrf.mxu0
      %v1438 = vpop.f32.mrf.mxu0
      %v1439 = vadd.f32 0.0, %v1438
      %v1440 = vpop.f32.mrf.mxu0
      %1441 = vmatprep.mubr.bf16.mxu0 0
      %1442 = vmatmul.mubr.bf16.gmra.mxu0 %v1381
      %v1443 = vpop.f32.mrf.mxu0
      %v1444 = vadd.f32 0.0, %v1443
      %v1445 = vpop.f32.mrf.mxu0
      %v1446 = vpop.f32.mrf.mxu0
      %v1447 = vadd.f32 0.0, %v1446
      %v1448 = vpop.f32.mrf.mxu0
      %1449 = vmatprep.mubr.bf16.mxu0 0
      %1450 = vmatmul.mubr.bf16.gmra.mxu0 %v1384
      %v1451 = vpop.f32.mrf.mxu0
      %v1452 = vadd.f32 0.0, %v1451
      %v1453 = vpop.f32.mrf.mxu0
      %v1454 = vpop.f32.mrf.mxu0
      %v1455 = vadd.f32 0.0, %v1454
      %v1456 = vpop.f32.mrf.mxu0
      %1457 = vmatprep.mubr.bf16.mxu0 0
      %1458 = vmatmul.mubr.bf16.gmra.mxu0 %v1387
      %v1459 = vpop.f32.mrf.mxu0
      %v1460 = vadd.f32 0.0, %v1459
      %v1461 = vpop.f32.mrf.mxu0
      %v1462 = vpop.f32.mrf.mxu0
      %v1463 = vadd.f32 0.0, %v1462
      %v1464 = vpop.f32.mrf.mxu0
      %1465 = vdwg.mxu0
      %v1466 = vmul.f32 %v1436, %v449
      %v1467 = vmul.f32 %v1439, %v449
      %v1468 = vmul.f32 %v1444, %v449
      %v1469 = vmul.f32 %v1447, %v449
      %v1470 = vmul.f32 %v1452, %v449
      %v1471 = vmul.f32 %v1455, %v449
      %v1472 = vmul.f32 %v1460, %v449
      %v1473 = vmul.f32 %v1463, %v449
      %v1474 = vsel %vm458, %v1466, -inf
      %1475 = vmax.xlane.f32.xlu0 %v1474
      %v1476 = vpop.xlane.xlu0 %1475
      %v1477 = vsel %vm458, %v1467, -inf
      %1478 = vmax.xlane.f32.xlu0 %v1477
      %v1479 = vpop.xlane.xlu0 %1478
      %v1480 = vsel %vm458, %v1468, -inf
      %1481 = vmax.xlane.f32.xlu0 %v1480
      %v1482 = vpop.xlane.xlu0 %1481
      %v1483 = vsel %vm458, %v1469, -inf
      %1484 = vmax.xlane.f32.xlu0 %v1483
      %v1485 = vpop.xlane.xlu0 %1484
      %v1486 = vsel %vm458, %v1470, -inf
      %1487 = vmax.xlane.f32.xlu0 %v1486
      %v1488 = vpop.xlane.xlu0 %1487
      %v1489 = vsel %vm458, %v1471, -inf
      %1490 = vmax.xlane.f32.xlu0 %v1489
      %v1491 = vpop.xlane.xlu0 %1490
      %v1492 = vsel %vm458, %v1472, -inf
      %1493 = vmax.xlane.f32.xlu0 %v1492
      %v1494 = vpop.xlane.xlu0 %1493
      %v1495 = vsel %vm458, %v1473, -inf
      %1496 = vmax.xlane.f32.xlu0 %v1495
      %v1497 = vpop.xlane.xlu0 %1496
      %v1498 = vsub.f32 %v1466, %v1476
      %v1499 = vsub.f32 %v1467, %v1479
      %v1500 = vsub.f32 %v1468, %v1482
      %v1501 = vsub.f32 %v1469, %v1485
      %v1502 = vsub.f32 %v1470, %v1488
      %v1503 = vsub.f32 %v1471, %v1491
      %v1504 = vsub.f32 %v1472, %v1494
      %v1505 = vsub.f32 %v1473, %v1497
      %v1506 = vmul.f32 %v1498, 1.442695
      %v1507 = vpow.pop %v1506
      %v1508 = vmul.f32 %v1499, 1.442695
      %v1509 = vpow.pop %v1508
      %v1510 = vmul.f32 %v1500, 1.442695
      %v1511 = vpow.pop %v1510
      %v1512 = vmul.f32 %v1501, 1.442695
      %v1513 = vpow.pop %v1512
      %v1514 = vmul.f32 %v1502, 1.442695
      %v1515 = vpow.pop %v1514
      %v1516 = vmul.f32 %v1503, 1.442695
      %v1517 = vpow.pop %v1516
      %v1518 = vmul.f32 %v1504, 1.442695
      %v1519 = vpow.pop %v1518
      %v1520 = vmul.f32 %v1505, 1.442695
      %v1521 = vpow.pop %v1520
      %v1522 = vsel %vm458, %v1507, 0.0
      %1523 = vadd.xlane.f32.xlu0 %v1522
      %v1524 = vpop.xlane.xlu0 %1523
      %v1525 = vsel %vm458, %v1509, 0.0
      %1526 = vadd.xlane.f32.xlu0 %v1525
      %v1527 = vpop.xlane.xlu0 %1526
      %v1528 = vsel %vm458, %v1511, 0.0
      %1529 = vadd.xlane.f32.xlu0 %v1528
      %v1530 = vpop.xlane.xlu0 %1529
      %v1531 = vsel %vm458, %v1513, 0.0
      %1532 = vadd.xlane.f32.xlu0 %v1531
      %v1533 = vpop.xlane.xlu0 %1532
      %v1534 = vsel %vm458, %v1515, 0.0
      %1535 = vadd.xlane.f32.xlu0 %v1534
      %v1536 = vpop.xlane.xlu0 %1535
      %v1537 = vsel %vm458, %v1517, 0.0
      %1538 = vadd.xlane.f32.xlu0 %v1537
      %v1539 = vpop.xlane.xlu0 %1538
      %v1540 = vsel %vm458, %v1519, 0.0
      %1541 = vadd.xlane.f32.xlu0 %v1540
      %v1542 = vpop.xlane.xlu0 %1541
      %v1543 = vsel %vm458, %v1521, 0.0
      %1544 = vadd.xlane.f32.xlu0 %v1543
      %v1545 = vpop.xlane.xlu0 %1544
      %v1546 = vrcp.pop %v1524
      %v1547 = vrcp.pop %v1527
      %v1548 = vrcp.pop %v1530
      %v1549 = vrcp.pop %v1533
      %v1550 = vrcp.pop %v1536
      %v1551 = vrcp.pop %v1539
      %v1552 = vrcp.pop %v1542
      %v1553 = vrcp.pop %v1545
      %v1554 = vmul.f32 %v1507, %v1546
      %v1555 = vmul.f32 %v1509, %v1547
      %v1556 = vmul.f32 %v1511, %v1548
      %v1557 = vmul.f32 %v1513, %v1549
      %v1558 = vmul.f32 %v1515, %v1550
      %v1559 = vmul.f32 %v1517, %v1551
      %v1560 = vmul.f32 %v1519, %v1552
      %v1561 = vmul.f32 %v1521, %v1553
      %s1562 = scalar_lea.vmem %s308, 192
      %v1563 = vld [vmem:[%s1562] sm:$0xff]
      %v1564 = vld [vmem:[%s1562 + $0x8] sm:$0xff]
      %v1565 = vld [vmem:[%s1562 + $0x10] sm:$0xff]
      %v1566 = vld [vmem:[%s1562 + $0x18] sm:$0xff]
      %v1567 = vld [vmem:[%s1562 + $0x20] sm:$0xff]
      %v1568 = vld [vmem:[%s1562 + $0x28] sm:$0xff]
      %v1569 = vld [vmem:[%s1562 + $0x30] sm:$0xff]
      %v1570 = vld [vmem:[%s1562 + $0x38] sm:$0xff]
      %vm1571 = vcmp.ge.f32.partialorder %v1563, %v555
      %vm1572 = vcmp.ge.f32.partialorder %v1564, %v555
      %vm1573 = vcmp.ge.f32.partialorder %v1565, %v555
      %vm1574 = vcmp.ge.f32.partialorder %v1566, %v555
      %vm1575 = vcmp.ge.f32.partialorder %v1567, %v555
      %vm1576 = vcmp.ge.f32.partialorder %v1568, %v555
      %vm1577 = vcmp.ge.f32.partialorder %v1569, %v555
      %vm1578 = vcmp.ge.f32.partialorder %v1570, %v555
      %v1579 = vmul.f32 %v1554, %v564
      %v1580 = vmul.f32 %v1555, %v564
      %v1581 = vmul.f32 %v1556, %v564
      %v1582 = vmul.f32 %v1557, %v564
      %v1583 = vmul.f32 %v1558, %v564
      %v1584 = vmul.f32 %v1559, %v564
      %v1585 = vmul.f32 %v1560, %v564
      %v1586 = vmul.f32 %v1561, %v564
      %v1587 = vsel %vm1571, %v1579, 0.0
      %v1588 = vsel %vm1572, %v1580, 0.0
      %v1589 = vsel %vm1573, %v1581, 0.0
      %v1590 = vsel %vm1574, %v1582, 0.0
      %v1591 = vsel %vm1575, %v1583, 0.0
      %v1592 = vsel %vm1576, %v1584, 0.0
      %v1593 = vsel %vm1577, %v1585, 0.0
      %v1594 = vsel %vm1578, %v1586, 0.0
      %v1595 = vpack.c.bf16 %v1588, %v1587
      %v1596 = vpack.c.bf16 %v1590, %v1589
      %v1597 = vpack.c.bf16 %v1592, %v1591
      %v1598 = vpack.c.bf16 %v1594, %v1593
      %v1600 = vsel %vm458, %v1595, 0
      %v1603 = vsel %vm458, %v1596, 0
      %v1606 = vsel %vm458, %v1597, 0
      %v1609 = vsel %vm458, %v1598, 0
      %1611 = vmatprep.subr.bf16.mxu0 0
      %1612 = vmatpush1.bf16.msra.mxu0 0
      %1613 = vmatprep.subr.bf16.mxu0 0
      %1614 = vmatpush1.bf16.msra.mxu0 0
      %1615 = vmatprep.subr.bf16.mxu0 0
      %1616 = vmatpush1.bf16.msra.mxu0 0
      %1617 = vmatprep.subr.bf16.mxu0 0
      %1618 = vmatpush1.bf16.msra.mxu0 0
      %1619 = vmatprep.subr.bf16.mxu0 0
      %1620 = vmatpush1.bf16.msra.mxu0 %v1376
      %1621 = vmatprep.subr.bf16.mxu0 0
      %1622 = vmatpush1.bf16.msra.mxu0 %v1375
      %1623 = vmatprep.subr.bf16.mxu0 0
      %1624 = vmatpush1.bf16.msra.mxu0 %v1374
      %1625 = vmatprep.subr.bf16.mxu0 0
      %1626 = vmatpush1.bf16.msra.mxu0 %v1373
      %1627 = vmatprep.subr.bf16.mxu0 0
      %1628 = vmatpush2.bf16.msra.mxu0 0
      %1629 = vmatprep.subr.bf16.mxu0 0
      %1630 = vmatpush2.bf16.msra.mxu0 0
      %1631 = vmatprep.subr.bf16.mxu0 0
      %1632 = vmatpush2.bf16.msra.mxu0 0
      %1633 = vmatprep.subr.bf16.mxu0 0
      %1634 = vmatpush2.bf16.msra.mxu0 0
      %1635 = vmatprep.subr.bf16.mxu0 0
      %1636 = vmatpush2.bf16.msra.mxu0 0
      %1637 = vmatprep.subr.bf16.mxu0 0
      %1638 = vmatpush2.bf16.msra.mxu0 0
      %1639 = vmatprep.subr.bf16.mxu0 0
      %1640 = vmatpush2.bf16.msra.mxu0 0
      %1641 = vmatprep.subr.bf16.mxu0 0
      %1642 = vmatpush2.bf16.msra.mxu0 0
      %1643 = vmatprep.mubr.bf16.mxu0 0
      %1644 = vmatmul.mubr.bf16.gmra.mxu0 %v1600
      %v1645 = vpop.f32.mrf.mxu0
      %v1646 = vadd.f32 0.0, %v1645
      %v1647 = vpop.f32.mrf.mxu0
      %v1648 = vpop.f32.mrf.mxu0
      %v1649 = vadd.f32 0.0, %v1648
      %v1650 = vpop.f32.mrf.mxu0
      %1651 = vmatprep.mubr.bf16.mxu0 0
      %1652 = vmatmul.mubr.bf16.gmra.mxu0 %v1603
      %v1653 = vpop.f32.mrf.mxu0
      %v1654 = vadd.f32 0.0, %v1653
      %v1655 = vpop.f32.mrf.mxu0
      %v1656 = vpop.f32.mrf.mxu0
      %v1657 = vadd.f32 0.0, %v1656
      %v1658 = vpop.f32.mrf.mxu0
      %1659 = vmatprep.mubr.bf16.mxu0 0
      %1660 = vmatmul.mubr.bf16.gmra.mxu0 %v1606
      %v1661 = vpop.f32.mrf.mxu0
      %v1662 = vadd.f32 0.0, %v1661
      %v1663 = vpop.f32.mrf.mxu0
      %v1664 = vpop.f32.mrf.mxu0
      %v1665 = vadd.f32 0.0, %v1664
      %v1666 = vpop.f32.mrf.mxu0
      %1667 = vmatprep.mubr.bf16.mxu0 0
      %1668 = vmatmul.mubr.bf16.gmra.mxu0 %v1609
      %v1669 = vpop.f32.mrf.mxu0
      %v1670 = vadd.f32 0.0, %v1669
      %v1671 = vpop.f32.mrf.mxu0
      %v1672 = vpop.f32.mrf.mxu0
      %v1673 = vadd.f32 0.0, %v1672
      %v1674 = vpop.f32.mrf.mxu0
      %1675 = vdwg.mxu0
      %1684 = vrot.lane.b32.xlu0 %v970, 32
      %v1685 = vpop.permute.xlu0 %1684
      %1686 = vrot.lane.b32.xlu0 %v973, 32
      %v1687 = vpop.permute.xlu0 %1686
      %1688 = vrot.lane.b32.xlu0 %v978, 32
      %v1689 = vpop.permute.xlu0 %1688
      %1690 = vrot.lane.b32.xlu0 %v981, 32
      %v1691 = vpop.permute.xlu0 %1690
      %1692 = vrot.lane.b32.xlu0 %v986, 32
      %v1693 = vpop.permute.xlu0 %1692
      %1694 = vrot.lane.b32.xlu0 %v989, 32
      %v1695 = vpop.permute.xlu0 %1694
      %1696 = vrot.lane.b32.xlu0 %v994, 32
      %v1697 = vpop.permute.xlu0 %1696
      %1698 = vrot.lane.b32.xlu0 %v997, 32
      %v1699 = vpop.permute.xlu0 %1698
      %1716 = vrot.lane.b32.xlu0 %v1308, 64
      %v1717 = vpop.permute.xlu0 %1716
      %1718 = vrot.lane.b32.xlu0 %v1311, 64
      %v1719 = vpop.permute.xlu0 %1718
      %1720 = vrot.lane.b32.xlu0 %v1316, 64
      %v1721 = vpop.permute.xlu0 %1720
      %1722 = vrot.lane.b32.xlu0 %v1319, 64
      %v1723 = vpop.permute.xlu0 %1722
      %1724 = vrot.lane.b32.xlu0 %v1324, 64
      %v1725 = vpop.permute.xlu0 %1724
      %1726 = vrot.lane.b32.xlu0 %v1327, 64
      %v1727 = vpop.permute.xlu0 %1726
      %1728 = vrot.lane.b32.xlu0 %v1332, 64
      %v1729 = vpop.permute.xlu0 %1728
      %1730 = vrot.lane.b32.xlu0 %v1335, 64
      %v1731 = vpop.permute.xlu0 %1730
      %1748 = vrot.lane.b32.xlu0 %v1646, 96
      %v1749 = vpop.permute.xlu0 %1748
      %1750 = vrot.lane.b32.xlu0 %v1649, 96
      %v1751 = vpop.permute.xlu0 %1750
      %1752 = vrot.lane.b32.xlu0 %v1654, 96
      %v1753 = vpop.permute.xlu0 %1752
      %1754 = vrot.lane.b32.xlu0 %v1657, 96
      %v1755 = vpop.permute.xlu0 %1754
      %1756 = vrot.lane.b32.xlu0 %v1662, 96
      %v1757 = vpop.permute.xlu0 %1756
      %1758 = vrot.lane.b32.xlu0 %v1665, 96
      %v1759 = vpop.permute.xlu0 %1758
      %1760 = vrot.lane.b32.xlu0 %v1670, 96
      %v1761 = vpop.permute.xlu0 %1760
      %1762 = vrot.lane.b32.xlu0 %v1673, 96
      %v1763 = vpop.permute.xlu0 %1762
      %v1772 = vsel %vm359, %v632, %v1685
      %v1773 = vsel %vm359, %v635, %v1687
      %v1774 = vsel %vm359, %v640, %v1689
      %v1775 = vsel %vm359, %v643, %v1691
      %v1776 = vsel %vm359, %v648, %v1693
      %v1777 = vsel %vm359, %v651, %v1695
      %v1778 = vsel %vm359, %v656, %v1697
      %v1779 = vsel %vm359, %v659, %v1699
      %v1780 = vsel %vm458, %v1772, %v1717
      %v1781 = vsel %vm458, %v1773, %v1719
      %v1782 = vsel %vm458, %v1774, %v1721
      %v1783 = vsel %vm458, %v1775, %v1723
      %v1784 = vsel %vm458, %v1776, %v1725
      %v1785 = vsel %vm458, %v1777, %v1727
      %v1786 = vsel %vm458, %v1778, %v1729
      %v1787 = vsel %vm458, %v1779, %v1731
      %vm1788 = vcmask 785408
      %v1789 = vsel %vm1788, %v1780, %v1749
      %v1790 = vsel %vm1788, %v1781, %v1751
      %v1791 = vsel %vm1788, %v1782, %v1753
      %v1792 = vsel %vm1788, %v1783, %v1755
      %v1793 = vsel %vm1788, %v1784, %v1757
      %v1794 = vsel %vm1788, %v1785, %v1759
      %v1795 = vsel %vm1788, %v1786, %v1761
      %v1796 = vsel %vm1788, %v1787, %v1763
      %1797 = vst [vmem:[%s313] sm:$0xff] %v1789
      %1798 = vst [vmem:[%s313 + $0x8] sm:$0xff] %v1790
      %1799 = vst [vmem:[%s313 + $0x10] sm:$0xff] %v1791
      %1800 = vst [vmem:[%s313 + $0x18] sm:$0xff] %v1792
      %1801 = vst [vmem:[%s313 + $0x20] sm:$0xff] %v1793
      %1802 = vst [vmem:[%s313 + $0x28] sm:$0xff] %v1794
      %1803 = vst [vmem:[%s313 + $0x30] sm:$0xff] %v1795
      %1804 = vst [vmem:[%s313 + $0x38] sm:$0xff] %v1796
      %p1805 = scmp.lt.s32.totalorder %s19, 1
      %s1806 = scalar_select %p1805, %s19, 1
      %s1807 = smul.addr %s1806, 8
      %s1808 = smul.addr %s1807, 8
      %s1809 = scalar_lea.vmem %s6, %s1808
      // Predicated region
      $region45: #{sdpa_dropout.1} parent=43 // pred_check
        %p1810 = pneg %p183
      $region46: #{sdpa_dropout.1} parent=43 // pred_check_branch
        %1812 = sbr.rel (%p1810) target = $region48
      $region47: #{sdpa_dropout.1} parent=43 // pred_region
        _
      $region48: #{sdpa_dropout.1} parent=43 // pred_fallthru
        _
    $region44: #{sdpa_dropout.1} parent=5 // pred_fallthru
      _
    %p1813 = scmp.le.s32.totalorder 2, %s14
    // Predicated region
    $region49: #{sdpa_dropout.1} parent=5 // pred_check
      %p1814 = pneg %p1813
    $region50: #{sdpa_dropout.1} parent=5 // pred_check_branch
      %1816 = sbr.rel (%p1814) target = $region52
    $region51: #{sdpa_dropout.1} parent=5 // pred_region
      %s1817 = ssub.s32 %s14, 2
      // Predicated region
      $region53: #{sdpa_dropout.1} parent=51 // pred_check
        %p1818 = pneg %p189
      $region54: #{sdpa_dropout.1} parent=51 // pred_check_branch
        %1820 = sbr.rel (%p1818) target = $region56
      $region55: #{sdpa_dropout.1} parent=51 // pred_region
        %p1821 = scmp.lt.s32.totalorder %s20, 1
        %s1822 = scalar_select %p1821, %s20, 1
        %s1823 = smul.addr %s1822, 8
        %s1824 = smul.addr %s1823, 8
        %s1825 = scalar_lea.vmem %s6, %s1824
      $region56: #{sdpa_dropout.1} parent=51 // pred_fallthru
        _
    $region52: #{sdpa_dropout.1} parent=5 // pred_fallthru
      _
  $region6: #{sdpa_dropout.1} parent=0 // loop_footer
    %s18 = sadd.s32 1, %s14
  $region7: #{sdpa_dropout.1} parent=0 // loop_footer_branch
    %13 = sbr.rel target = $region3
  $region8: #{sdpa_dropout.1} parent=0 // loop_exit
    _

</llo_original>
